<compile_context>
chip_gen: v7x
topology: tpu7x:2x2x1
jax: 0.10.0
libtpu: 0.0.40
codegen_flags: <defaults>
</compile_context>

<pallas_src>
import functools

import numpy as np
import jax
import jax.numpy as jnp
from jax import lax
from jax.experimental import pallas as pl
from jax.experimental.pallas import tpu as pltpu


def _round_up(x, m):
    return (x + m - 1) // m * m


# ----------------------------------------------------------------------------
# Pallas GEMM with fused pre-activation + per-column affine (bias/BN) + post-act
# ----------------------------------------------------------------------------
@functools.lru_cache(maxsize=None)
def _gemm_kernel(pre_act, post_act, single_k):
    # NOTE: fusing pre_act into the GEMM relies on f(0) == 0 (true for relu / lrelu),
    # so conv zero-padding rows of A are unaffected.  Do not add activations with
    # f(0) != 0 here without moving them out of the kernel.
    def _apply_pre(a):
        if pre_act == 'relu':
            return jnp.maximum(a, 0)
        if pre_act == 'lrelu':          # LeakyReLU(0.2)
            return jnp.where(a > 0, a, a * 0.2)
        return a

    def _apply_post(r):
        if post_act == 'tanh':
            return jnp.tanh(r)
        if post_act == 'relu':
            return jnp.maximum(r, 0.0)
        return r

    def kernel_single(a_ref, b_ref, sc_ref, sh_ref, o_ref):
        # Single K step: no accumulator scratch, no init/finalize phases.
        a = _apply_pre(a_ref[...])
        r = jnp.dot(a, b_ref[...], preferred_element_type=jnp.float32)
        r = r * sc_ref[...] + sh_ref[...]           # f32 epilogue (bias / inference BN)
        o_ref[...] = _apply_post(r).astype(o_ref.dtype)

    def kernel_multi(a_ref, b_ref, sc_ref, sh_ref, o_ref, acc_ref):
        @pl.when(pl.program_id(2) == 0)
        def _():
            acc_ref[...] = jnp.zeros_like(acc_ref)

        a = _apply_pre(a_ref[...])
        acc_ref[...] += jnp.dot(a, b_ref[...], preferred_element_type=jnp.float32)

        @pl.when(pl.program_id(2) == pl.num_programs(2) - 1)
        def _():
            r = acc_ref[...] * sc_ref[...] + sh_ref[...]
            o_ref[...] = _apply_post(r).astype(o_ref.dtype)

    return kernel_single if single_k else kernel_multi


def matmul_fused(a, b, scale, shift, pre_act='none', post_act='none',
                 out_dtype=jnp.bfloat16):
    """post_act((pre_act(a) @ b) * scale + shift); scale/shift are (1, N) float32."""
    M, K = a.shape
    K2, N = b.shape
    assert K == K2 and scale.shape == (1, N) and shift.shape == (1, N)
    a = a.astype(jnp.bfloat16)
    b = b.astype(jnp.bfloat16)

    # Tile choice: full-extent blocks whenever a dim fits its cap (block dim == array dim
    # is exempt from the (16,128) divisibility rule) -> no padding, no trailing slice, no
    # dead MXU columns.  Caps sized for the 256-wide MXU; tiles here are tiny (KBs).
    TK = K if K <= 1024 else 512
    TN = N if N <= 256 else 256
    if M <= 256:
        # Split M in two when it is large enough so the leading "parallel" grid axis gives
        # v7x's second TensorCore work (costs one extra ~0.35us grid step on 1-TC chips).
        TM = M // 2 if (M >= 64 and (M // 2) % 16 == 0) else M
    else:
        TM = 256
    Mp, Np, Kp = _round_up(M, TM), _round_up(N, TN), _round_up(K, TK)
    if (Mp, Kp) != (M, K):
        a = jnp.pad(a, ((0, Mp - M), (0, Kp - K)))
    if (Kp, Np) != (K, N):
        b = jnp.pad(b, ((0, Kp - K), (0, Np - N)))
    if Np != N:
        scale = jnp.pad(scale, ((0, 0), (0, Np - N)))
        shift = jnp.pad(shift, ((0, 0), (0, Np - N)))

    gm, gn, gk = Mp // TM, Np // TN, Kp // TK
    single_k = gk == 1

    out = pl.pallas_call(
        _gemm_kernel(pre_act, post_act, single_k),
        out_shape=jax.ShapeDtypeStruct((Mp, Np), out_dtype),
        grid_spec=pltpu.PrefetchScalarGridSpec(
            num_scalar_prefetch=0,
            grid=(gm, gn, gk),
            in_specs=[
                pl.BlockSpec((TM, TK), lambda i, j, k: (i, k)),
                pl.BlockSpec((TK, TN), lambda i, j, k: (k, j)),
                pl.BlockSpec((1, TN), lambda i, j, k: (0, j)),
                pl.BlockSpec((1, TN), lambda i, j, k: (0, j)),
            ],
            out_specs=pl.BlockSpec((TM, TN), lambda i, j, k: (i, j)),
            scratch_shapes=([] if single_k
                            else [pltpu.VMEM((TM, TN), jnp.float32)]),
        ),
        compiler_params=pltpu.CompilerParams(
            dimension_semantics=("parallel", "parallel", "arbitrary"),
            # Conservative for v7x's 64 MiB VMEM; tiles here are far below this anyway.
            vmem_limit_bytes=48 << 20),
    )(a, b, scale.astype(jnp.float32), shift.astype(jnp.float32))
    if (Mp, Np) != (M, N):
        out = out[:M, :N]
    return out


# ----------------------------------------------------------------------------
# Parameter preparation: fold BN/bias -> (scale, shift), pre-cast weights to bf16,
# build the fused 4-phase transposed-conv weight.  Done ONCE at build time.
# ----------------------------------------------------------------------------
def _affine_from(bias, bn, cout):
    scale = jnp.ones((cout,), jnp.float32)
    shift = (bias.astype(jnp.float32) if bias is not None
             else jnp.zeros((cout,), jnp.float32))
    if bn is not None:   # inference-mode BatchNorm (running stats)
        s = bn['gamma'] * lax.rsqrt(bn['var'] + 1e-5)
        shift = s * (shift - bn['mean']) + bn['beta']
        scale = s
    return scale, shift


def prepare_down(w, bias=None, bn=None):
    """Conv2d(k=4, s=2, p=1) -> GEMM-ready B (bf16) + folded (scale, shift)."""
    KH, KW, Cin, Cout = w.shape
    scale, shift = _affine_from(bias, bn, Cout)
    return {'B': w.reshape(KH * KW * Cin, Cout).astype(jnp.bfloat16),
            'scale': scale.reshape(1, Cout), 'shift': shift.reshape(1, Cout),
            'cout': Cout}


def prepare_up(wf, bias=None, bn=None):
    """ConvTranspose2d(k=4, s=2, p=1) -> ONE GEMM for all four sub-pixel phases.

    Output phase (r, s) of the transposed conv equals a 2x2 stride-1 conv of the input
    (padded by 1) with sub-kernel wf[r::2, s::2], evaluated at window offset (r, s).
    Zero-embedding each phase's 2x2 sub-kernel into a 3x3 kernel lets all four phases
    share a single 3x3 im2col A; concatenating them along Cout gives B: (9*Cin, 4*Cout).
    """
    KH, KW, Cin, Cout = wf.shape
    assert (KH, KW) == (4, 4)
    scale, shift = _affine_from(bias, bn, Cout)
    blocks = []
    for r in (0, 1):
        for s in (0, 1):
            k3 = jnp.zeros((3, 3, Cin, Cout), jnp.float32)
            k3 = k3.at[r:r + 2, s:s + 2].set(wf[r::2, s::2])
            blocks.append(k3)
    wcat = jnp.concatenate(blocks, axis=-1)                  # (3, 3, Cin, 4*Cout)
    return {'B': wcat.reshape(9 * Cin, 4 * Cout).astype(jnp.bfloat16),
            'scale': jnp.tile(scale, 4).reshape(1, 4 * Cout),
            'shift': jnp.tile(shift, 4).reshape(1, 4 * Cout),
            'cout': Cout}


def prepare_unet(p):
    pp = {'outermost': p['outermost'], 'innermost': p['innermost'], 'submodule': None}
    pp['down'] = prepare_down(p['downconv']['w'], bias=p['downconv'].get('b'),
                              bn=p.get('downnorm'))
    pp['up'] = prepare_up(p['upconv']['w'], bias=p['upconv'].get('b'),
                          bn=p.get('upnorm'))
    if p['submodule'] is not None:
        pp['submodule'] = prepare_unet(p['submodule'])
    return pp


# ----------------------------------------------------------------------------
# Conv / ConvTranspose built on the fused Pallas GEMM
# ----------------------------------------------------------------------------
def down_conv(x, p, pre_act='none'):
    """Conv2d(k=4, s=2, p=1), NHWC.  Pre-activation (LeakyReLU) is fused into the GEMM
    (valid because lrelu(0) == 0, so the conv's zero padding is unaffected)."""
    Nb, H, W, Cin = x.shape
    x = x.astype(jnp.bfloat16)
    xp = jnp.pad(x, ((0, 0), (1, 1), (1, 1), (0, 0)))
    OH, OW = H // 2, W // 2
    # TODO(synk): at production shapes (192x192) move patch extraction into the GEMM
    # pipeline ((kh,kw,Cin-chunk) on the K grid axis over a pl.ANY-space input) instead of
    # materializing im2col; at these toy shapes A is only a few KiB.
    cols = []
    for i in range(4):
        for j in range(4):
            cols.append(lax.slice(xp, (0, i, j, 0),
                                  (Nb, i + 2 * (OH - 1) + 1, j + 2 * (OW - 1) + 1, Cin),
                                  (1, 2, 2, 1)))
    A = jnp.stack(cols, axis=3).reshape(Nb * OH * OW, 16 * Cin)
    out = matmul_fused(A, p['B'], p['scale'], p['shift'], pre_act=pre_act)
    return out.reshape(Nb, OH, OW, p['cout'])


def up_conv(x, p, post_act='none', out_dtype=jnp.bfloat16):
    """ConvTranspose2d(k=4, s=2, p=1), NHWC: all four sub-pixel phases in ONE GEMM.
    ReLU pre-activation, bias / inference BN and optional Tanh are fused in-kernel."""
    Nb, H, W, Cin = x.shape
    Cout = p['cout']
    x = x.astype(jnp.bfloat16)
    xq = jnp.pad(x, ((0, 0), (1, 1), (1, 1), (0, 0)))
    cols = []
    for u in range(3):
        for v in range(3):
            cols.append(lax.slice(xq, (0, u, v, 0), (Nb, u + H, v + W, Cin)))
    A = jnp.stack(cols, axis=3).reshape(Nb * H * W, 9 * Cin)
    out = matmul_fused(A, p['B'], p['scale'], p['shift'],
                       pre_act='relu', post_act=post_act, out_dtype=out_dtype)
    # Lane-dense (Nb*H*W, 4*Cout) slab -> single depth-to-space interleave.
    out = out.reshape(Nb, H, W, 2, 2, Cout).transpose(0, 1, 3, 2, 4, 5)
    return out.reshape(Nb, 2 * H, 2 * W, Cout)


# ----------------------------------------------------------------------------
# UnetSkipConnectionBlock.forward (Pallas path): 6 fused-GEMM pallas_calls total
# ----------------------------------------------------------------------------
def unet_forward(pp, x):
    """Faithful to the PyTorch forward:
       outermost: downconv -> submodule -> [ReLU, upconvT, Tanh]
       innermost: [LeakyReLU, downconv] -> [ReLU, upconvT, BN]            -> cat(out, x)
       middle:    [LeakyReLU, downconv, BN] -> submodule -> [ReLU, upconvT, BN] -> cat(out, x)
    """
    # TODO(synk): the ambitious version keeps a whole level's intermediates in VMEM
    # scratch inside one kernel; kept as separate calls here for clarity/robustness.
    if pp['outermost']:
        y = down_conv(x, pp['down'])
        y = unet_forward(pp['submodule'], y)
        return up_conv(y, pp['up'], post_act='tanh', out_dtype=jnp.float32)
    if pp['innermost']:
        y = down_conv(x, pp['down'], pre_act='lrelu')
        y = up_conv(y, pp['up'])
        return jnp.concatenate([y, x.astype(y.dtype)], axis=-1)
    y = down_conv(x, pp['down'], pre_act='lrelu')
    y = unet_forward(pp['submodule'], y)
    y = up_conv(y, pp['up'])
    return jnp.concatenate([y, x.astype(y.dtype)], axis=-1)


# ----------------------------------------------------------------------------
# Pure-JAX f32 reference (lax convs) of the torch forward — used for validation
# ----------------------------------------------------------------------------
def _conv_ref(x, w, stride, padding):
    return lax.conv_general_dilated(
        x, w, (stride, stride), ((padding, padding), (padding, padding)),
        dimension_numbers=('NHWC', 'HWIO', 'NHWC'), precision=lax.Precision.HIGHEST)


def _convT_ref(x, wf):
    # ConvTranspose2d(k=4, s=2, p=1) in flipped-conv form: fractionally strided conv.
    return lax.conv_general_dilated(
        x, wf, (1, 1), ((2, 2), (2, 2)), lhs_dilation=(2, 2),
        dimension_numbers=('NHWC', 'HWIO', 'NHWC'), precision=lax.Precision.HIGHEST)


def _bn_ref(z, b):
    return b['gamma'] * lax.rsqrt(b['var'] + 1e-5) * (z - b['mean']) + b['beta']


def unet_forward_ref(p, x):
    if p['outermost']:
        y = _conv_ref(x, p['downconv']['w'], 2, 1)
        y = unet_forward_ref(p['submodule'], y)
        y = _convT_ref(jax.nn.relu(y), p['upconv']['w']) + p['upconv']['b']
        return jnp.tanh(y)
    if p['innermost']:
        y = _conv_ref(jnp.where(x > 0, x, 0.2 * x), p['downconv']['w'], 2, 1)
        y = _bn_ref(_convT_ref(jax.nn.relu(y), p['upconv']['w']), p['upnorm'])
        return jnp.concatenate([y, x], axis=-1)
    y = _bn_ref(_conv_ref(jnp.where(x > 0, x, 0.2 * x), p['downconv']['w'], 2, 1),
                p['downnorm'])
    y = unet_forward_ref(p['submodule'], y)
    y = _bn_ref(_convT_ref(jax.nn.relu(y), p['upconv']['w']), p['upnorm'])
    return jnp.concatenate([y, x], axis=-1)


# ----------------------------------------------------------------------------
# Deterministic synthetic parameters
# ----------------------------------------------------------------------------
class KeyGen:
    def __init__(self, seed):
        self.key = jax.random.PRNGKey(seed)

    def __call__(self):
        self.key, k = jax.random.split(self.key)
        return k


def conv_p(kg, kh, kw, cin, cout, bias=False):
    w = jax.random.normal(kg(), (kh, kw, cin, cout), jnp.float32) / np.sqrt(kh * kw * cin)
    p = {'w': w}
    if bias:
        p['b'] = 0.05 * jax.random.normal(kg(), (cout,), jnp.float32)
    return p


def bn_p(kg, c):
    # Non-trivial running stats so the folded inference-BN path is actually exercised
    # by the numerical cross-check.
    return {'gamma': 1.0 + 0.2 * jax.random.normal(kg(), (c,), jnp.float32),
            'beta': 0.1 * jax.random.normal(kg(), (c,), jnp.float32),
            'mean': 0.1 * jax.random.normal(kg(), (c,), jnp.float32),
            'var': 1.0 + 0.2 * jnp.abs(jax.random.normal(kg(), (c,), jnp.float32))}


def unet_block_p(kg, outer_nc, inner_nc, *, outermost=False, innermost=False,
                 submodule=None):
    # norm_layer = BatchNorm2d  =>  use_bias = False for downconv and inner/mid upconv.
    p = {'outermost': outermost, 'innermost': innermost, 'submodule': submodule}
    p['downconv'] = conv_p(kg, 4, 4, outer_nc, inner_nc)                     # bias=False
    if outermost:
        p['upconv'] = conv_p(kg, 4, 4, inner_nc * 2, outer_nc, bias=True)    # default bias
    elif innermost:
        p['upconv'] = conv_p(kg, 4, 4, inner_nc, outer_nc)
        p['upnorm'] = bn_p(kg, outer_nc)
    else:
        p['upconv'] = conv_p(kg, 4, 4, inner_nc * 2, outer_nc)
        p['downnorm'] = bn_p(kg, inner_nc)
        p['upnorm'] = bn_p(kg, outer_nc)
    return p


if __name__ == "__main__":
    # Small shapes: batch=2, 16x16 spatial, 4 input channels (NHWC).
    Nb, H, W, C = 2, 16, 16, 4
    x = jax.random.normal(jax.random.PRNGKey(0), (Nb, H, W, C), jnp.float32)

    kg = KeyGen(0)
    inner = unet_block_p(kg, 16, 32, innermost=True)                # 4x4 -> 2x2 -> 4x4
    mid = unet_block_p(kg, 8, 16, submodule=inner)                  # 8x8 -> 4x4 -> 8x8
    outer = unet_block_p(kg, 4, 8, outermost=True, submodule=mid)   # 16  -> 8   -> 16
    prepared = prepare_unet(outer)

    fwd = jax.jit(functools.partial(unet_forward, prepared))
    out = jax.block_until_ready(fwd(x))
    assert out.shape == (Nb, H, W, 4), out.shape
    out32 = out.astype(jnp.float32)
    assert bool(jnp.all(jnp.isfinite(out32)))

    # Numerical cross-check of the full stack (transposed-conv sub-pixel decomposition,
    # phase interleave, fused pre-acts and BN/bias folds) against the f32 lax reference.
    ref = jax.jit(functools.partial(unet_forward_ref, outer))(x)
    max_err = float(jnp.max(jnp.abs(out32 - ref)))
    mean_err = float(jnp.mean(jnp.abs(out32 - ref)))
    # bf16 GEMM operands / intermediate activations vs f32 reference -> loose tolerance.
    assert max_err < 1.5e-1 and mean_err < 3e-2, (max_err, mean_err)

    print("KERNEL_OK")
</pallas_src>

<mosaic_0001>
module attributes {stable_mosaic.version = 11 : i64} {
  func.func @kernel_single(%arg0: i32, %arg1: i32, %arg2: i32, %arg3: memref<64x64xbf16, #tpu.memory_space<vmem>>, %arg4: memref<64x8xbf16, #tpu.memory_space<vmem>>, %arg5: memref<1x8xf32, #tpu.memory_space<vmem>>, %arg6: memref<1x8xf32, #tpu.memory_space<vmem>>, %arg7: memref<64x8xbf16, #tpu.memory_space<vmem>>) attributes {dimension_semantics = [#tpu.dimension_semantics<parallel>, #tpu.dimension_semantics<parallel>, #tpu.dimension_semantics<arbitrary>], iteration_bounds = array<i64: 2, 1, 1>, scalar_prefetch = 0 : i64, scratch_operands = 0 : i64, tpu.core_type = #tpu.core_type<tc>, window_params = [{transform_indices = @transform_0, window_bounds = array<i64: 64, 64>}, {transform_indices = @transform_1, window_bounds = array<i64: 64, 8>}, {transform_indices = @transform_2, window_bounds = array<i64: 1, 8>}, {transform_indices = @transform_3, window_bounds = array<i64: 1, 8>}, {transform_indices = @transform_4, window_bounds = array<i64: 64, 8>}]} {
    %c0 = arith.constant 0 : index
    %c0_0 = arith.constant 0 : index
    %0 = vector.load %arg3[%c0, %c0_0] : memref<64x64xbf16, #tpu.memory_space<vmem>>, vector<64x64xbf16>
    %c0_1 = arith.constant 0 : index
    %c0_2 = arith.constant 0 : index
    %1 = vector.load %arg4[%c0_1, %c0_2] : memref<64x8xbf16, #tpu.memory_space<vmem>>, vector<64x8xbf16>
    %cst = arith.constant dense<0.000000e+00> : vector<64x8xf32>
    %2 = tpu.matmul %0, %1, %cst {dimension_numbers = #tpu.dot_dimension_numbers<[1], [0], [0], [1], [0, 0, 1, 1], [], []>} : vector<64x64xbf16>, vector<64x8xbf16>, vector<64x8xf32> -> vector<64x8xf32>
    %c0_3 = arith.constant 0 : index
    %c0_4 = arith.constant 0 : index
    %3 = vector.load %arg5[%c0_3, %c0_4] : memref<1x8xf32, #tpu.memory_space<vmem>>, vector<1x8xf32>
    %4 = vector.broadcast %3 : vector<1x8xf32> to vector<64x8xf32>
    %5 = arith.mulf %2, %4 : vector<64x8xf32>
    %c0_5 = arith.constant 0 : index
    %c0_6 = arith.constant 0 : index
    %6 = vector.load %arg6[%c0_5, %c0_6] : memref<1x8xf32, #tpu.memory_space<vmem>>, vector<1x8xf32>
    %7 = vector.broadcast %6 : vector<1x8xf32> to vector<64x8xf32>
    %8 = arith.addf %5, %7 : vector<64x8xf32>
    %9 = arith.truncf %8 : vector<64x8xf32> to vector<64x8xbf16>
    %c0_7 = arith.constant 0 : index
    %c0_8 = arith.constant 0 : index
    %10 = vector.load %arg7[%c0_7, %c0_8] : memref<64x8xbf16, #tpu.memory_space<vmem>>, vector<64x8xbf16>
    tpu.vector_store %arg7[%c0_7, %c0_8], %9 {strides = array<i32>} : memref<64x8xbf16, #tpu.memory_space<vmem>>, vector<64x8xbf16>,
    return
  }
  func.func @transform_0(%arg0: i32, %arg1: i32, %arg2: i32) -> (i32, i32) {
    %c0_i32 = arith.constant 0 : i32
    return %arg0, %arg2 : i32, i32
  }
  func.func @transform_1(%arg0: i32, %arg1: i32, %arg2: i32) -> (i32, i32) {
    %c0_i32 = arith.constant 0 : i32
    return %arg2, %arg1 : i32, i32
  }
  func.func @transform_2(%arg0: i32, %arg1: i32, %arg2: i32) -> (i32, i32) {
    %c0_i32 = arith.constant 0 : i32
    %c0_i32_0 = arith.constant 0 : i32
    return %c0_i32, %arg1 : i32, i32
  }
  func.func @transform_3(%arg0: i32, %arg1: i32, %arg2: i32) -> (i32, i32) {
    %c0_i32 = arith.constant 0 : i32
    %c0_i32_0 = arith.constant 0 : i32
    return %c0_i32, %arg1 : i32, i32
  }
  func.func @transform_4(%arg0: i32, %arg1: i32, %arg2: i32) -> (i32, i32) {
    %c0_i32 = arith.constant 0 : i32
    return %arg0, %arg1 : i32, i32
  }
}

module attributes {stable_mosaic.version = 11 : i64} {
  func.func @kernel_single(%arg0: i32, %arg1: i32, %arg2: i32, %arg3: memref<32x128xbf16, #tpu.memory_space<vmem>>, %arg4: memref<128x16xbf16, #tpu.memory_space<vmem>>, %arg5: memref<1x16xf32, #tpu.memory_space<vmem>>, %arg6: memref<1x16xf32, #tpu.memory_space<vmem>>, %arg7: memref<32x16xbf16, #tpu.memory_space<vmem>>) attributes {dimension_semantics = [#tpu.dimension_semantics<parallel>, #tpu.dimension_semantics<parallel>, #tpu.dimension_semantics<arbitrary>], iteration_bounds = array<i64: 1, 1, 1>, scalar_prefetch = 0 : i64, scratch_operands = 0 : i64, tpu.core_type = #tpu.core_type<tc>, window_params = [{transform_indices = @transform_0, window_bounds = array<i64: 32, 128>}, {transform_indices = @transform_1, window_bounds = array<i64: 128, 16>}, {transform_indices = @transform_2, window_bounds = array<i64: 1, 16>}, {transform_indices = @transform_3, window_bounds = array<i64: 1, 16>}, {transform_indices = @transform_4, window_bounds = array<i64: 32, 16>}]} {
    %c0 = arith.constant 0 : index
    %c0_0 = arith.constant 0 : index
    %0 = vector.load %arg3[%c0, %c0_0] : memref<32x128xbf16, #tpu.memory_space<vmem>>, vector<32x128xbf16>
    %cst = arith.constant 0.000000e+00 : bf16
    %1 = vector.broadcast %cst : bf16 to vector<32x128xbf16>
    %2 = arith.cmpf ogt, %0, %1 : vector<32x128xbf16>
    %cst_1 = arith.constant 2.001950e-01 : bf16
    %3 = vector.broadcast %cst_1 : bf16 to vector<32x128xbf16>
    %4 = arith.mulf %0, %3 : vector<32x128xbf16>
    %5 = arith.select %2, %0, %4 : vector<32x128xi1>, vector<32x128xbf16>
    %c0_2 = arith.constant 0 : index
    %c0_3 = arith.constant 0 : index
    %6 = vector.load %arg4[%c0_2, %c0_3] : memref<128x16xbf16, #tpu.memory_space<vmem>>, vector<128x16xbf16>
    %cst_4 = arith.constant dense<0.000000e+00> : vector<32x16xf32>
    %7 = tpu.matmul %5, %6, %cst_4 {dimension_numbers = #tpu.dot_dimension_numbers<[1], [0], [0], [1], [0, 0, 1, 1], [], []>} : vector<32x128xbf16>, vector<128x16xbf16>, vector<32x16xf32> -> vector<32x16xf32>
    %c0_5 = arith.constant 0 : index
    %c0_6 = arith.constant 0 : index
    %8 = vector.load %arg5[%c0_5, %c0_6] : memref<1x16xf32, #tpu.memory_space<vmem>>, vector<1x16xf32>
    %9 = vector.broadcast %8 : vector<1x16xf32> to vector<32x16xf32>
    %10 = arith.mulf %7, %9 : vector<32x16xf32>
    %c0_7 = arith.constant 0 : index
    %c0_8 = arith.constant 0 : index
    %11 = vector.load %arg6[%c0_7, %c0_8] : memref<1x16xf32, #tpu.memory_space<vmem>>, vector<1x16xf32>
    %12 = vector.broadcast %11 : vector<1x16xf32> to vector<32x16xf32>
    %13 = arith.addf %10, %12 : vector<32x16xf32>
    %14 = arith.truncf %13 : vector<32x16xf32> to vector<32x16xbf16>
    %c0_9 = arith.constant 0 : index
    %c0_10 = arith.constant 0 : index
    %15 = vector.load %arg7[%c0_9, %c0_10] : memref<32x16xbf16, #tpu.memory_space<vmem>>, vector<32x16xbf16>
    tpu.vector_store %arg7[%c0_9, %c0_10], %14 {strides = array<i32>} : memref<32x16xbf16, #tpu.memory_space<vmem>>, vector<32x16xbf16>,
    return
  }
  func.func @transform_0(%arg0: i32, %arg1: i32, %arg2: i32) -> (i32, i32) {
    %c0_i32 = arith.constant 0 : i32
    return %arg0, %arg2 : i32, i32
  }
  func.func @transform_1(%arg0: i32, %arg1: i32, %arg2: i32) -> (i32, i32) {
    %c0_i32 = arith.constant 0 : i32
    return %arg2, %arg1 : i32, i32
  }
  func.func @transform_2(%arg0: i32, %arg1: i32, %arg2: i32) -> (i32, i32) {
    %c0_i32 = arith.constant 0 : i32
    %c0_i32_0 = arith.constant 0 : i32
    return %c0_i32, %arg1 : i32, i32
  }
  func.func @transform_3(%arg0: i32, %arg1: i32, %arg2: i32) -> (i32, i32) {
    %c0_i32 = arith.constant 0 : i32
    %c0_i32_0 = arith.constant 0 : i32
    return %c0_i32, %arg1 : i32, i32
  }
  func.func @transform_4(%arg0: i32, %arg1: i32, %arg2: i32) -> (i32, i32) {
    %c0_i32 = arith.constant 0 : i32
    return %arg0, %arg1 : i32, i32
  }
}

module attributes {stable_mosaic.version = 11 : i64} {
  func.func @kernel_single(%arg0: i32, %arg1: i32, %arg2: i32, %arg3: memref<8x256xbf16, #tpu.memory_space<vmem>>, %arg4: memref<256x32xbf16, #tpu.memory_space<vmem>>, %arg5: memref<1x32xf32, #tpu.memory_space<vmem>>, %arg6: memref<1x32xf32, #tpu.memory_space<vmem>>, %arg7: memref<8x32xbf16, #tpu.memory_space<vmem>>) attributes {dimension_semantics = [#tpu.dimension_semantics<parallel>, #tpu.dimension_semantics<parallel>, #tpu.dimension_semantics<arbitrary>], iteration_bounds = array<i64: 1, 1, 1>, scalar_prefetch = 0 : i64, scratch_operands = 0 : i64, tpu.core_type = #tpu.core_type<tc>, window_params = [{transform_indices = @transform_0, window_bounds = array<i64: 8, 256>}, {transform_indices = @transform_1, window_bounds = array<i64: 256, 32>}, {transform_indices = @transform_2, window_bounds = array<i64: 1, 32>}, {transform_indices = @transform_3, window_bounds = array<i64: 1, 32>}, {transform_indices = @transform_4, window_bounds = array<i64: 8, 32>}]} {
    %c0 = arith.constant 0 : index
    %c0_0 = arith.constant 0 : index
    %0 = vector.load %arg3[%c0, %c0_0] : memref<8x256xbf16, #tpu.memory_space<vmem>>, vector<8x256xbf16>
    %cst = arith.constant 0.000000e+00 : bf16
    %1 = vector.broadcast %cst : bf16 to vector<8x256xbf16>
    %2 = arith.cmpf ogt, %0, %1 : vector<8x256xbf16>
    %cst_1 = arith.constant 2.001950e-01 : bf16
    %3 = vector.broadcast %cst_1 : bf16 to vector<8x256xbf16>
    %4 = arith.mulf %0, %3 : vector<8x256xbf16>
    %5 = arith.select %2, %0, %4 : vector<8x256xi1>, vector<8x256xbf16>
    %c0_2 = arith.constant 0 : index
    %c0_3 = arith.constant 0 : index
    %6 = vector.load %arg4[%c0_2, %c0_3] : memref<256x32xbf16, #tpu.memory_space<vmem>>, vector<256x32xbf16>
    %cst_4 = arith.constant dense<0.000000e+00> : vector<8x32xf32>
    %7 = tpu.matmul %5, %6, %cst_4 {dimension_numbers = #tpu.dot_dimension_numbers<[1], [0], [0], [1], [0, 0, 1, 1], [], []>} : vector<8x256xbf16>, vector<256x32xbf16>, vector<8x32xf32> -> vector<8x32xf32>
    %c0_5 = arith.constant 0 : index
    %c0_6 = arith.constant 0 : index
    %8 = vector.load %arg5[%c0_5, %c0_6] : memref<1x32xf32, #tpu.memory_space<vmem>>, vector<1x32xf32>
    %9 = vector.broadcast %8 : vector<1x32xf32> to vector<8x32xf32>
    %10 = arith.mulf %7, %9 : vector<8x32xf32>
    %c0_7 = arith.constant 0 : index
    %c0_8 = arith.constant 0 : index
    %11 = vector.load %arg6[%c0_7, %c0_8] : memref<1x32xf32, #tpu.memory_space<vmem>>, vector<1x32xf32>
    %12 = vector.broadcast %11 : vector<1x32xf32> to vector<8x32xf32>
    %13 = arith.addf %10, %12 : vector<8x32xf32>
    %14 = arith.truncf %13 : vector<8x32xf32> to vector<8x32xbf16>
    %c0_9 = arith.constant 0 : index
    %c0_10 = arith.constant 0 : index
    %15 = vector.load %arg7[%c0_9, %c0_10] : memref<8x32xbf16, #tpu.memory_space<vmem>>, vector<8x32xbf16>
    tpu.vector_store %arg7[%c0_9, %c0_10], %14 {strides = array<i32>} : memref<8x32xbf16, #tpu.memory_space<vmem>>, vector<8x32xbf16>,
    return
  }
  func.func @transform_0(%arg0: i32, %arg1: i32, %arg2: i32) -> (i32, i32) {
    %c0_i32 = arith.constant 0 : i32
    return %arg0, %arg2 : i32, i32
  }
  func.func @transform_1(%arg0: i32, %arg1: i32, %arg2: i32) -> (i32, i32) {
    %c0_i32 = arith.constant 0 : i32
    return %arg2, %arg1 : i32, i32
  }
  func.func @transform_2(%arg0: i32, %arg1: i32, %arg2: i32) -> (i32, i32) {
    %c0_i32 = arith.constant 0 : i32
    %c0_i32_0 = arith.constant 0 : i32
    return %c0_i32, %arg1 : i32, i32
  }
  func.func @transform_3(%arg0: i32, %arg1: i32, %arg2: i32) -> (i32, i32) {
    %c0_i32 = arith.constant 0 : i32
    %c0_i32_0 = arith.constant 0 : i32
    return %c0_i32, %arg1 : i32, i32
  }
  func.func @transform_4(%arg0: i32, %arg1: i32, %arg2: i32) -> (i32, i32) {
    %c0_i32 = arith.constant 0 : i32
    return %arg0, %arg1 : i32, i32
  }
}

module attributes {stable_mosaic.version = 11 : i64} {
  func.func @kernel_single(%arg0: i32, %arg1: i32, %arg2: i32, %arg3: memref<8x288xbf16, #tpu.memory_space<vmem>>, %arg4: memref<288x64xbf16, #tpu.memory_space<vmem>>, %arg5: memref<1x64xf32, #tpu.memory_space<vmem>>, %arg6: memref<1x64xf32, #tpu.memory_space<vmem>>, %arg7: memref<8x64xbf16, #tpu.memory_space<vmem>>) attributes {dimension_semantics = [#tpu.dimension_semantics<parallel>, #tpu.dimension_semantics<parallel>, #tpu.dimension_semantics<arbitrary>], iteration_bounds = array<i64: 1, 1, 1>, scalar_prefetch = 0 : i64, scratch_operands = 0 : i64, tpu.core_type = #tpu.core_type<tc>, window_params = [{transform_indices = @transform_0, window_bounds = array<i64: 8, 288>}, {transform_indices = @transform_1, window_bounds = array<i64: 288, 64>}, {transform_indices = @transform_2, window_bounds = array<i64: 1, 64>}, {transform_indices = @transform_3, window_bounds = array<i64: 1, 64>}, {transform_indices = @transform_4, window_bounds = array<i64: 8, 64>}]} {
    %c0 = arith.constant 0 : index
    %c0_0 = arith.constant 0 : index
    %0 = vector.load %arg3[%c0, %c0_0] : memref<8x288xbf16, #tpu.memory_space<vmem>>, vector<8x288xbf16>
    %cst = arith.constant 0.000000e+00 : bf16
    %1 = vector.broadcast %cst : bf16 to vector<8x288xbf16>
    %2 = arith.maximumf %0, %1 : vector<8x288xbf16>
    %c0_1 = arith.constant 0 : index
    %c0_2 = arith.constant 0 : index
    %3 = vector.load %arg4[%c0_1, %c0_2] : memref<288x64xbf16, #tpu.memory_space<vmem>>, vector<288x64xbf16>
    %cst_3 = arith.constant dense<0.000000e+00> : vector<8x64xf32>
    %4 = tpu.matmul %2, %3, %cst_3 {dimension_numbers = #tpu.dot_dimension_numbers<[1], [0], [0], [1], [0, 0, 1, 1], [], []>} : vector<8x288xbf16>, vector<288x64xbf16>, vector<8x64xf32> -> vector<8x64xf32>
    %c0_4 = arith.constant 0 : index
    %c0_5 = arith.constant 0 : index
    %5 = vector.load %arg5[%c0_4, %c0_5] : memref<1x64xf32, #tpu.memory_space<vmem>>, vector<1x64xf32>
    %6 = vector.broadcast %5 : vector<1x64xf32> to vector<8x64xf32>
    %7 = arith.mulf %4, %6 : vector<8x64xf32>
    %c0_6 = arith.constant 0 : index
    %c0_7 = arith.constant 0 : index
    %8 = vector.load %arg6[%c0_6, %c0_7] : memref<1x64xf32, #tpu.memory_space<vmem>>, vector<1x64xf32>
    %9 = vector.broadcast %8 : vector<1x64xf32> to vector<8x64xf32>
    %10 = arith.addf %7, %9 : vector<8x64xf32>
    %11 = arith.truncf %10 : vector<8x64xf32> to vector<8x64xbf16>
    %c0_8 = arith.constant 0 : index
    %c0_9 = arith.constant 0 : index
    %12 = vector.load %arg7[%c0_8, %c0_9] : memref<8x64xbf16, #tpu.memory_space<vmem>>, vector<8x64xbf16>
    tpu.vector_store %arg7[%c0_8, %c0_9], %11 {strides = array<i32>} : memref<8x64xbf16, #tpu.memory_space<vmem>>, vector<8x64xbf16>,
    return
  }
  func.func @transform_0(%arg0: i32, %arg1: i32, %arg2: i32) -> (i32, i32) {
    %c0_i32 = arith.constant 0 : i32
    return %arg0, %arg2 : i32, i32
  }
  func.func @transform_1(%arg0: i32, %arg1: i32, %arg2: i32) -> (i32, i32) {
    %c0_i32 = arith.constant 0 : i32
    return %arg2, %arg1 : i32, i32
  }
  func.func @transform_2(%arg0: i32, %arg1: i32, %arg2: i32) -> (i32, i32) {
    %c0_i32 = arith.constant 0 : i32
    %c0_i32_0 = arith.constant 0 : i32
    return %c0_i32, %arg1 : i32, i32
  }
  func.func @transform_3(%arg0: i32, %arg1: i32, %arg2: i32) -> (i32, i32) {
    %c0_i32 = arith.constant 0 : i32
    %c0_i32_0 = arith.constant 0 : i32
    return %c0_i32, %arg1 : i32, i32
  }
  func.func @transform_4(%arg0: i32, %arg1: i32, %arg2: i32) -> (i32, i32) {
    %c0_i32 = arith.constant 0 : i32
    return %arg0, %arg1 : i32, i32
  }
}

module attributes {stable_mosaic.version = 11 : i64} {
  func.func @kernel_single(%arg0: i32, %arg1: i32, %arg2: i32, %arg3: memref<32x288xbf16, #tpu.memory_space<vmem>>, %arg4: memref<288x32xbf16, #tpu.memory_space<vmem>>, %arg5: memref<1x32xf32, #tpu.memory_space<vmem>>, %arg6: memref<1x32xf32, #tpu.memory_space<vmem>>, %arg7: memref<32x32xbf16, #tpu.memory_space<vmem>>) attributes {dimension_semantics = [#tpu.dimension_semantics<parallel>, #tpu.dimension_semantics<parallel>, #tpu.dimension_semantics<arbitrary>], iteration_bounds = array<i64: 1, 1, 1>, scalar_prefetch = 0 : i64, scratch_operands = 0 : i64, tpu.core_type = #tpu.core_type<tc>, window_params = [{transform_indices = @transform_0, window_bounds = array<i64: 32, 288>}, {transform_indices = @transform_1, window_bounds = array<i64: 288, 32>}, {transform_indices = @transform_2, window_bounds = array<i64: 1, 32>}, {transform_indices = @transform_3, window_bounds = array<i64: 1, 32>}, {transform_indices = @transform_4, window_bounds = array<i64: 32, 32>}]} {
    %c0 = arith.constant 0 : index
    %c0_0 = arith.constant 0 : index
    %0 = vector.load %arg3[%c0, %c0_0] : memref<32x288xbf16, #tpu.memory_space<vmem>>, vector<32x288xbf16>
    %cst = arith.constant 0.000000e+00 : bf16
    %1 = vector.broadcast %cst : bf16 to vector<32x288xbf16>
    %2 = arith.maximumf %0, %1 : vector<32x288xbf16>
    %c0_1 = arith.constant 0 : index
    %c0_2 = arith.constant 0 : index
    %3 = vector.load %arg4[%c0_1, %c0_2] : memref<288x32xbf16, #tpu.memory_space<vmem>>, vector<288x32xbf16>
    %cst_3 = arith.constant dense<0.000000e+00> : vector<32x32xf32>
    %4 = tpu.matmul %2, %3, %cst_3 {dimension_numbers = #tpu.dot_dimension_numbers<[1], [0], [0], [1], [0, 0, 1, 1], [], []>} : vector<32x288xbf16>, vector<288x32xbf16>, vector<32x32xf32> -> vector<32x32xf32>
    %c0_4 = arith.constant 0 : index
    %c0_5 = arith.constant 0 : index
    %5 = vector.load %arg5[%c0_4, %c0_5] : memref<1x32xf32, #tpu.memory_space<vmem>>, vector<1x32xf32>
    %6 = vector.broadcast %5 : vector<1x32xf32> to vector<32x32xf32>
    %7 = arith.mulf %4, %6 : vector<32x32xf32>
    %c0_6 = arith.constant 0 : index
    %c0_7 = arith.constant 0 : index
    %8 = vector.load %arg6[%c0_6, %c0_7] : memref<1x32xf32, #tpu.memory_space<vmem>>, vector<1x32xf32>
    %9 = vector.broadcast %8 : vector<1x32xf32> to vector<32x32xf32>
    %10 = arith.addf %7, %9 : vector<32x32xf32>
    %11 = arith.truncf %10 : vector<32x32xf32> to vector<32x32xbf16>
    %c0_8 = arith.constant 0 : index
    %c0_9 = arith.constant 0 : index
    %12 = vector.load %arg7[%c0_8, %c0_9] : memref<32x32xbf16, #tpu.memory_space<vmem>>, vector<32x32xbf16>
    tpu.vector_store %arg7[%c0_8, %c0_9], %11 {strides = array<i32>} : memref<32x32xbf16, #tpu.memory_space<vmem>>, vector<32x32xbf16>,
    return
  }
  func.func @transform_0(%arg0: i32, %arg1: i32, %arg2: i32) -> (i32, i32) {
    %c0_i32 = arith.constant 0 : i32
    return %arg0, %arg2 : i32, i32
  }
  func.func @transform_1(%arg0: i32, %arg1: i32, %arg2: i32) -> (i32, i32) {
    %c0_i32 = arith.constant 0 : i32
    return %arg2, %arg1 : i32, i32
  }
  func.func @transform_2(%arg0: i32, %arg1: i32, %arg2: i32) -> (i32, i32) {
    %c0_i32 = arith.constant 0 : i32
    %c0_i32_0 = arith.constant 0 : i32
    return %c0_i32, %arg1 : i32, i32
  }
  func.func @transform_3(%arg0: i32, %arg1: i32, %arg2: i32) -> (i32, i32) {
    %c0_i32 = arith.constant 0 : i32
    %c0_i32_0 = arith.constant 0 : i32
    return %c0_i32, %arg1 : i32, i32
  }
  func.func @transform_4(%arg0: i32, %arg1: i32, %arg2: i32) -> (i32, i32) {
    %c0_i32 = arith.constant 0 : i32
    return %arg0, %arg1 : i32, i32
  }
}

module attributes {stable_mosaic.version = 11 : i64} {
  func.func @kernel_single(%arg0: i32, %arg1: i32, %arg2: i32, %arg3: memref<64x144xbf16, #tpu.memory_space<vmem>>, %arg4: memref<144x16xbf16, #tpu.memory_space<vmem>>, %arg5: memref<1x16xf32, #tpu.memory_space<vmem>>, %arg6: memref<1x16xf32, #tpu.memory_space<vmem>>, %arg7: memref<64x16xf32, #tpu.memory_space<vmem>>) attributes {dimension_semantics = [#tpu.dimension_semantics<parallel>, #tpu.dimension_semantics<parallel>, #tpu.dimension_semantics<arbitrary>], iteration_bounds = array<i64: 2, 1, 1>, scalar_prefetch = 0 : i64, scratch_operands = 0 : i64, tpu.core_type = #tpu.core_type<tc>, window_params = [{transform_indices = @transform_0, window_bounds = array<i64: 64, 144>}, {transform_indices = @transform_1, window_bounds = array<i64: 144, 16>}, {transform_indices = @transform_2, window_bounds = array<i64: 1, 16>}, {transform_indices = @transform_3, window_bounds = array<i64: 1, 16>}, {transform_indices = @transform_4, window_bounds = array<i64: 64, 16>}]} {
    %c0 = arith.constant 0 : index
    %c0_0 = arith.constant 0 : index
    %0 = vector.load %arg3[%c0, %c0_0] : memref<64x144xbf16, #tpu.memory_space<vmem>>, vector<64x144xbf16>
    %cst = arith.constant 0.000000e+00 : bf16
    %1 = vector.broadcast %cst : bf16 to vector<64x144xbf16>
    %2 = arith.maximumf %0, %1 : vector<64x144xbf16>
    %c0_1 = arith.constant 0 : index
    %c0_2 = arith.constant 0 : index
    %3 = vector.load %arg4[%c0_1, %c0_2] : memref<144x16xbf16, #tpu.memory_space<vmem>>, vector<144x16xbf16>
    %cst_3 = arith.constant dense<0.000000e+00> : vector<64x16xf32>
    %4 = tpu.matmul %2, %3, %cst_3 {dimension_numbers = #tpu.dot_dimension_numbers<[1], [0], [0], [1], [0, 0, 1, 1], [], []>} : vector<64x144xbf16>, vector<144x16xbf16>, vector<64x16xf32> -> vector<64x16xf32>
    %c0_4 = arith.constant 0 : index
    %c0_5 = arith.constant 0 : index
    %5 = vector.load %arg5[%c0_4, %c0_5] : memref<1x16xf32, #tpu.memory_space<vmem>>, vector<1x16xf32>
    %6 = vector.broadcast %5 : vector<1x16xf32> to vector<64x16xf32>
    %7 = arith.mulf %4, %6 : vector<64x16xf32>
    %c0_6 = arith.constant 0 : index
    %c0_7 = arith.constant 0 : index
    %8 = vector.load %arg6[%c0_6, %c0_7] : memref<1x16xf32, #tpu.memory_space<vmem>>, vector<1x16xf32>
    %9 = vector.broadcast %8 : vector<1x16xf32> to vector<64x16xf32>
    %10 = arith.addf %7, %9 : vector<64x16xf32>
    %11 = math.tanh %10 : vector<64x16xf32>
    %c0_8 = arith.constant 0 : index
    %c0_9 = arith.constant 0 : index
    %12 = vector.load %arg7[%c0_8, %c0_9] : memref<64x16xf32, #tpu.memory_space<vmem>>, vector<64x16xf32>
    tpu.vector_store %arg7[%c0_8, %c0_9], %11 {strides = array<i32>} : memref<64x16xf32, #tpu.memory_space<vmem>>, vector<64x16xf32>,
    return
  }
  func.func @transform_0(%arg0: i32, %arg1: i32, %arg2: i32) -> (i32, i32) {
    %c0_i32 = arith.constant 0 : i32
    return %arg0, %arg2 : i32, i32
  }
  func.func @transform_1(%arg0: i32, %arg1: i32, %arg2: i32) -> (i32, i32) {
    %c0_i32 = arith.constant 0 : i32
    return %arg2, %arg1 : i32, i32
  }
  func.func @transform_2(%arg0: i32, %arg1: i32, %arg2: i32) -> (i32, i32) {
    %c0_i32 = arith.constant 0 : i32
    %c0_i32_0 = arith.constant 0 : i32
    return %c0_i32, %arg1 : i32, i32
  }
  func.func @transform_3(%arg0: i32, %arg1: i32, %arg2: i32) -> (i32, i32) {
    %c0_i32 = arith.constant 0 : i32
    %c0_i32_0 = arith.constant 0 : i32
    return %c0_i32, %arg1 : i32, i32
  }
  func.func @transform_4(%arg0: i32, %arg1: i32, %arg2: i32) -> (i32, i32) {
    %c0_i32 = arith.constant 0 : i32
    return %arg0, %arg1 : i32, i32
  }
}

</mosaic_0001>

<llo_original>
// kernel: unet_forward.6
$region0: #{unet_forward.6}
  #allocation0 [shape = 'u32[]', space=smem, size = 0x4, offset = 0x4, fixed_abs, tag = 'smem constant byte address 0x4 - core index']
  #allocation1 [shape = 'u32[144,128]{1,0:T(1,128)}', space=vmem, size = 0x12000, scoped, tag = 'internal scratch']
  %s0 = inlined_call_operand.vmem [shape: bf16[128,64], index: 0, kind: input, shape index: {}]
  %s1 = inlined_call_operand.vmem [shape: bf16[64,8], index: 1, kind: input, shape index: {}]
  %s2 = inlined_call_operand.vmem [shape: f32[1,8], index: 2, kind: input, shape index: {}]
  %s3 = inlined_call_operand.vmem [shape: f32[1,8], index: 3, kind: input, shape index: {}]
  %s4 = inlined_call_operand.vmem [shape: bf16[128,8], index: 4, kind: output, shape index: {}]
  %s5 = sld [smem:[#allocation0]]
  $region49: #{unet_forward.6} parent=0
    _
  %s7 = ssub.s32 1, %s5
  %s8 = scalar_select 0, %s7, %s5
  loop: start=0, step=1, limit=4
  $region2: #{unet_forward.6} parent=0 // loop_pre_header
    _
  $region3: #{unet_forward.6} parent=0 // loop_header
    %s10 = sphi 0, %s14
    %p11 = scmp.ge.s32.totalorder %s10, 4
    %s17 = sphi 0, %s36
    %s18 = sphi 0, %s32
    %s19 = sphi 0, %s28
    %s20 = sphi 0, %s17
    %s21 = sphi 0, %s18
    %s22 = sphi 0, %s19
    %s23 = sphi 0, %s20
    %s24 = sphi 0, %s21
    %s25 = sphi 0, %s22
    %s41 = sphi 0, %s43
    %s44 = sphi 0, %s41
    %s45 = sphi 0, %s44
    %s61 = sphi 0, %s45
    %s69 = sphi 0, %s71
    %s72 = sphi 0, %s69
    %s73 = sphi 0, %s72
    %s89 = sphi 0, %s73
    %s95 = sphi 0, %s97
    %s98 = sphi 0, %s95
    %s99 = sphi 0, %s98
    %s115 = sphi 0, %s99
    %s121 = sphi 0, %s123
    %s124 = sphi 0, %s121
    %s125 = sphi 0, %s124
    %s141 = sphi 0, %s125
    %s149 = sphi 0, %s151
    %s152 = sphi 0, %s149
    %s153 = sphi 0, %s152
    %s169 = sphi 0, %s153
  $region4: #{unet_forward.6} parent=0 // loop_header_branch
    %13 = sbr.rel (%p11) target = $region8
  $region5: #{unet_forward.6} parent=0 // loop_body
    %s15 = ssub.s32 %s10, 1
    %s16 = ssub.s32 %s10, 2
    %s26 = sadd.s32 1, %s19
    %p27 = scmp.ge.s32.totalorder %s26, 1
    %s28 = scalar_select %p27, 0, %s26
    %s29 = sadd.s32 1, %s18
    %s30 = scalar_select %p27, %s29, %s18
    %p31 = scmp.ge.s32.totalorder %s30, 1
    %s32 = scalar_select %p31, 0, %s30
    %s33 = sadd.s32 1, %s17
    %s34 = scalar_select %p31, %s33, %s17
    %p35 = scmp.ge.s32.totalorder %s34, 2
    %s36 = scalar_select %p35, 0, %s34
    %s37 = ssub.s32 %s17, %s36
    %s38 = ssub.s32 %s19, %s28
    %s39 = sor.u32 %s37, %s38
    %p40 = scmp.eq.s32.totalorder %s39, 0
    %s42 = sadd.s32 %s41, 1
    %s43 = scalar_select %p40, %s41, %s42
    %p46 = pneg %p40
    %p47 = scmp.eq.s32.totalorder %s10, 1
    %p48 = por %p46, %p47
    %p49 = scmp.ne.s32.totalorder %s41, %s44
    %p50 = scmp.eq.s32.totalorder %s10, 0
    %p51 = por %p49, %p50
    %p52 = scmp.ne.s32.totalorder %s41, %s44
    %p53 = scmp.eq.s32.totalorder %s15, 1
    %p54 = por %p52, %p53
    %p55 = scmp.ne.s32.totalorder %s44, %s45
    %p56 = scmp.eq.s32.totalorder %s15, 0
    %p57 = por %p55, %p56
    %p58 = scmp.ne.s32.totalorder %s44, %s45
    %p59 = scmp.eq.s32.totalorder %s16, 1
    %p60 = por %p58, %p59
    %p62 = scmp.ne.s32.totalorder %s45, %s61
    %p63 = scmp.eq.s32.totalorder %s16, 0
    %p64 = por %p62, %p63
    %s65 = ssub.s32 %s19, %s28
    %s66 = ssub.s32 %s18, %s32
    %s67 = sor.u32 %s65, %s66
    %p68 = scmp.eq.s32.totalorder %s67, 0
    %s70 = sadd.s32 %s69, 1
    %s71 = scalar_select %p68, %s69, %s70
    %p74 = pneg %p68
    %p75 = scmp.eq.s32.totalorder %s10, 1
    %p76 = por %p74, %p75
    %p77 = scmp.ne.s32.totalorder %s69, %s72
    %p78 = scmp.eq.s32.totalorder %s10, 0
    %p79 = por %p77, %p78
    %p80 = scmp.ne.s32.totalorder %s69, %s72
    %p81 = scmp.eq.s32.totalorder %s15, 1
    %p82 = por %p80, %p81
    %p83 = scmp.ne.s32.totalorder %s72, %s73
    %p84 = scmp.eq.s32.totalorder %s15, 0
    %p85 = por %p83, %p84
    %p86 = scmp.ne.s32.totalorder %s72, %s73
    %p87 = scmp.eq.s32.totalorder %s16, 1
    %p88 = por %p86, %p87
    %p90 = scmp.ne.s32.totalorder %s73, %s89
    %p91 = scmp.eq.s32.totalorder %s16, 0
    %p92 = por %p90, %p91
    %s93 = ssub.s32 %s18, %s32
    %p94 = scmp.eq.s32.totalorder %s93, 0
    %s96 = sadd.s32 %s95, 1
    %s97 = scalar_select %p94, %s95, %s96
    %p100 = pneg %p94
    %p101 = scmp.eq.s32.totalorder %s10, 1
    %p102 = por %p100, %p101
    %p103 = scmp.ne.s32.totalorder %s95, %s98
    %p104 = scmp.eq.s32.totalorder %s10, 0
    %p105 = por %p103, %p104
    %p106 = scmp.ne.s32.totalorder %s95, %s98
    %p107 = scmp.eq.s32.totalorder %s15, 1
    %p108 = por %p106, %p107
    %p109 = scmp.ne.s32.totalorder %s98, %s99
    %p110 = scmp.eq.s32.totalorder %s15, 0
    %p111 = por %p109, %p110
    %p112 = scmp.ne.s32.totalorder %s98, %s99
    %p113 = scmp.eq.s32.totalorder %s16, 1
    %p114 = por %p112, %p113
    %p116 = scmp.ne.s32.totalorder %s99, %s115
    %p117 = scmp.eq.s32.totalorder %s16, 0
    %p118 = por %p116, %p117
    %s119 = ssub.s32 %s18, %s32
    %p120 = scmp.eq.s32.totalorder %s119, 0
    %s122 = sadd.s32 %s121, 1
    %s123 = scalar_select %p120, %s121, %s122
    %p126 = pneg %p120
    %p127 = scmp.eq.s32.totalorder %s10, 1
    %p128 = por %p126, %p127
    %p129 = scmp.ne.s32.totalorder %s121, %s124
    %p130 = scmp.eq.s32.totalorder %s10, 0
    %p131 = por %p129, %p130
    %p132 = scmp.ne.s32.totalorder %s121, %s124
    %p133 = scmp.eq.s32.totalorder %s15, 1
    %p134 = por %p132, %p133
    %p135 = scmp.ne.s32.totalorder %s124, %s125
    %p136 = scmp.eq.s32.totalorder %s15, 0
    %p137 = por %p135, %p136
    %p138 = scmp.ne.s32.totalorder %s124, %s125
    %p139 = scmp.eq.s32.totalorder %s16, 1
    %p140 = por %p138, %p139
    %p142 = scmp.ne.s32.totalorder %s125, %s141
    %p143 = scmp.eq.s32.totalorder %s16, 0
    %p144 = por %p142, %p143
    %s145 = ssub.s32 %s17, %s36
    %s146 = ssub.s32 %s18, %s32
    %s147 = sor.u32 %s145, %s146
    %p148 = scmp.eq.s32.totalorder %s147, 0
    %s150 = sadd.s32 %s149, 1
    %s151 = scalar_select %p148, %s149, %s150
    %p154 = pneg %p148
    %p155 = scmp.eq.s32.totalorder %s10, 1
    %p156 = por %p154, %p155
    %p157 = scmp.ne.s32.totalorder %s149, %s152
    %p158 = scmp.eq.s32.totalorder %s10, 0
    %p159 = por %p157, %p158
    %p160 = scmp.ne.s32.totalorder %s149, %s152
    %p161 = scmp.eq.s32.totalorder %s15, 1
    %p162 = por %p160, %p161
    %p163 = scmp.ne.s32.totalorder %s152, %s153
    %p164 = scmp.eq.s32.totalorder %s15, 0
    %p165 = por %p163, %p164
    %p166 = scmp.ne.s32.totalorder %s152, %s153
    %p167 = scmp.eq.s32.totalorder %s16, 1
    %p168 = por %p166, %p167
    %p170 = scmp.ne.s32.totalorder %s153, %s169
    %p171 = scmp.eq.s32.totalorder %s16, 0
    %p172 = por %p170, %p171
    %p173 = scmp.le.s32.totalorder 1, %s10
    %p174 = scmp.lt.s32.totalorder %s10, 3
    %p175 = pnand %p173, %p174
    %p176 = pneg %p175
    // Predicated region
    $region9: #{unet_forward.6} parent=5 // pred_check
      _
    $region10: #{unet_forward.6} parent=5 // pred_check_branch
      %178 = sbr.rel (%p175) target = $region12
    $region11: #{unet_forward.6} parent=5 // pred_region
      %s179 = ssub.s32 %s10, 1
      // Predicated region
      $region13: #{unet_forward.6} parent=11 // pred_check
        %p180 = pneg %p85
      $region14: #{unet_forward.6} parent=11 // pred_check_branch
        %182 = sbr.rel (%p180) target = $region16
      $region15: #{unet_forward.6} parent=11 // pred_region
        %s183 = smul.u32 8, %s22
        %p184 = scmp.lt.s32.totalorder %s183, 7
        %s185 = scalar_select %p184, %s183, 7
        %p186 = scmp.lt.s32.totalorder %s21, 0
        %s187 = scalar_select %p186, %s21, 0
        %s188 = sadd.s32 %s187, %s185
        %s189 = smul.addr %s188, 4
        %s190 = scalar_lea.vmem %s1, %s189
        %s191 = smul.u32 8, %s22
      $region16: #{unet_forward.6} parent=11 // pred_fallthru
        _
      // Predicated region
      $region17: #{unet_forward.6} parent=11 // pred_check
        %p192 = pneg %p111
      $region18: #{unet_forward.6} parent=11 // pred_check_branch
        %194 = sbr.rel (%p192) target = $region20
      $region19: #{unet_forward.6} parent=11 // pred_region
        %p195 = scmp.lt.s32.totalorder %s21, 0
        %s196 = scalar_select %p195, %s21, 0
        %s197 = scalar_lea.vmem %s2, %s196
      $region20: #{unet_forward.6} parent=11 // pred_fallthru
        _
      // Predicated region
      $region21: #{unet_forward.6} parent=11 // pred_check
        %p198 = pneg %p137
      $region22: #{unet_forward.6} parent=11 // pred_check_branch
        %200 = sbr.rel (%p198) target = $region24
      $region23: #{unet_forward.6} parent=11 // pred_region
        %p201 = scmp.lt.s32.totalorder %s21, 0
        %s202 = scalar_select %p201, %s21, 0
        %s203 = scalar_lea.vmem %s3, %s202
      $region24: #{unet_forward.6} parent=11 // pred_fallthru
        _
    $region12: #{unet_forward.6} parent=5 // pred_fallthru
      _
    %p204 = scmp.lt.s32.totalorder %s10, 2
    // Predicated region
    $region25: #{unet_forward.6} parent=5 // pred_check
      %p205 = pneg %p204
    $region26: #{unet_forward.6} parent=5 // pred_check_branch
      %207 = sbr.rel (%p205) target = $region28
    $region27: #{unet_forward.6} parent=5 // pred_region
      // Predicated region
      $region29: #{unet_forward.6} parent=27 // pred_check
        %p208 = pneg %p51
      $region30: #{unet_forward.6} parent=27 // pred_check_branch
        %210 = sbr.rel (%p208) target = $region32
      $region31: #{unet_forward.6} parent=27 // pred_region
        %s211 = smul.u32 8, %s17
        %p212 = scmp.lt.s32.totalorder %s211, 15
        %s213 = scalar_select %p212, %s211, 15
        %p214 = scmp.lt.s32.totalorder %s19, 0
        %s215 = scalar_select %p214, %s19, 0
        %s216 = sadd.s32 %s215, %s213
        %s217 = smul.addr %s216, 4
        %s218 = scalar_lea.vmem %s0, %s217
        %s219 = smul.u32 8, %s17
      $region32: #{unet_forward.6} parent=27 // pred_fallthru
        _
    $region28: #{unet_forward.6} parent=5 // pred_fallthru
      _
    %p220 = scmp.le.s32.totalorder 1, %s10
    %p221 = scmp.lt.s32.totalorder %s10, 3
    %p222 = pnand %p220, %p221
    %p223 = pneg %p222
    // Predicated region
    $region33: #{unet_forward.6} parent=5 // pred_check
      _
    $region34: #{unet_forward.6} parent=5 // pred_check_branch
      %225 = sbr.rel (%p222) target = $region36
    $region35: #{unet_forward.6} parent=5 // pred_region
      %s226 = ssub.s32 %s10, 1
      %s227 = smul.u32 8, %s20
      %p228 = scmp.lt.s32.totalorder %s227, 15
      %s229 = scalar_select %p228, %s227, 15
      %p230 = scmp.lt.s32.totalorder %s22, 0
      %s231 = scalar_select %p230, %s22, 0
      %s232 = sadd.s32 %s231, %s229
      %s233 = smul.addr %s232, 4
      %s234 = scalar_lea.vmem %s0, %s233
      %p235 = pneg %p57
      %p236 = pneg %p54
      %s237 = smul.u32 8, %s22
      %p238 = scmp.lt.s32.totalorder %s237, 7
      %s239 = scalar_select %p238, %s237, 7
      %p240 = scmp.lt.s32.totalorder %s21, 0
      %s241 = scalar_select %p240, %s21, 0
      %s242 = sadd.s32 %s241, %s239
      %s243 = smul.addr %s242, 4
      %s244 = scalar_lea.vmem %s1, %s243
      %p245 = pneg %p85
      %p246 = pneg %p82
      %p247 = scmp.lt.s32.totalorder %s21, 0
      %s248 = scalar_select %p247, %s21, 0
      %s249 = scalar_lea.vmem %s2, %s248
      %p250 = pneg %p111
      %p251 = pneg %p108
      %p252 = scmp.lt.s32.totalorder %s21, 0
      %s253 = scalar_select %p252, %s21, 0
      %s254 = scalar_lea.vmem %s3, %s253
      %p255 = pneg %p137
      %p256 = pneg %p134
      %p257 = pneg %p165
      %p258 = pneg %p162
      %s259 = smul.u32 8, %s20
      %p260 = scmp.lt.s32.totalorder %s259, 15
      %s261 = scalar_select %p260, %s259, 15
      %p262 = scmp.lt.s32.totalorder %s21, 0
      %s263 = scalar_select %p262, %s21, 0
      %s264 = sadd.s32 %s263, %s261
      %s265 = smul.addr %s264, 4
      %s266 = scalar_lea.vmem %s4, %s265
      %s267 = smul.u32 8, %s20
      %p268 = scmp.lt.s32.totalorder %s267, 15
      %s269 = scalar_select %p268, %s267, 15
      %p270 = scmp.lt.s32.totalorder %s22, 0
      %s271 = scalar_select %p270, %s22, 0
      %s272 = sadd.s32 %s271, %s269
      %s273 = smul.addr %s272, 4
      %s274 = scalar_lea.vmem %s0, %s273
      %s275 = smul.u32 8, %s20
      %s276 = smul.u32 8, %s22
      %p277 = scmp.lt.s32.totalorder %s276, 7
      %s278 = scalar_select %p277, %s276, 7
      %p279 = scmp.lt.s32.totalorder %s21, 0
      %s280 = scalar_select %p279, %s21, 0
      %s281 = sadd.s32 %s280, %s278
      %s282 = smul.addr %s281, 4
      %s283 = scalar_lea.vmem %s1, %s282
      %s284 = smul.u32 8, %s22
      %p285 = scmp.lt.s32.totalorder %s21, 0
      %s286 = scalar_select %p285, %s21, 0
      %s287 = scalar_lea.vmem %s2, %s286
      %p288 = scmp.lt.s32.totalorder %s21, 0
      %s289 = scalar_select %p288, %s21, 0
      %s290 = scalar_lea.vmem %s3, %s289
      %s291 = smul.u32 8, %s20
      %p292 = scmp.lt.s32.totalorder %s291, 15
      %s293 = scalar_select %p292, %s291, 15
      %p294 = scmp.lt.s32.totalorder %s21, 0
      %s295 = scalar_select %p294, %s21, 0
      %s296 = sadd.s32 %s295, %s293
      %s297 = smul.addr %s296, 4
      %s298 = scalar_lea.vmem %s4, %s297
      %s299 = smul.u32 8, %s20
      %v301 = vld [vmem:[%s274] sm:$0xf]
      %v302 = vld [vmem:[%s274 + $0x4] sm:$0xf]
      %v303 = vld [vmem:[%s274 + $0x8] sm:$0xf]
      %v304 = vld [vmem:[%s274 + $0xc] sm:$0xf]
      %v305 = vld [vmem:[%s274 + $0x10] sm:$0xf]
      %v306 = vld [vmem:[%s274 + $0x14] sm:$0xf]
      %v307 = vld [vmem:[%s274 + $0x18] sm:$0xf]
      %v308 = vld [vmem:[%s274 + $0x1c] sm:$0xf]
      %v309 = vld [vmem:[%s283] sm:$0xf]
      %v310 = vld [vmem:[%s283 + $0x4] sm:$0xf]
      %v311 = vld [vmem:[%s283 + $0x8] sm:$0xf]
      %v312 = vld [vmem:[%s283 + $0xc] sm:$0xf]
      %v313 = vld [vmem:[%s283 + $0x10] sm:$0xf]
      %v314 = vld [vmem:[%s283 + $0x14] sm:$0xf]
      %v315 = vld [vmem:[%s283 + $0x18] sm:$0xf]
      %v316 = vld [vmem:[%s283 + $0x1c] sm:$0xf]
      %v325 = vunpack.c.l.b16 %v301
      %v326 = vunpack.c.l.b16 %v302
      %v327 = vunpack.c.l.b16 %v303
      %v328 = vunpack.c.l.b16 %v304
      %v329 = vunpack.c.l.b16 %v305
      %v330 = vunpack.c.l.b16 %v306
      %v331 = vunpack.c.l.b16 %v307
      %v332 = vunpack.c.l.b16 %v308
      %v333 = vpack.c.b16 %v326, %v325
      %v334 = vpack.c.b16 %v328, %v327
      %v335 = vpack.c.b16 %v330, %v329
      %v336 = vpack.c.b16 %v332, %v331
      %v345 = vunpack.c.l.b16 %v309
      %v346 = vunpack.c.l.b16 %v310
      %v347 = vunpack.c.l.b16 %v311
      %v348 = vunpack.c.l.b16 %v312
      %v349 = vunpack.c.l.b16 %v313
      %v350 = vunpack.c.l.b16 %v314
      %v351 = vunpack.c.l.b16 %v315
      %v352 = vunpack.c.l.b16 %v316
      %v353 = vpack.c.b16 %v346, %v345
      %v354 = vpack.c.b16 %v348, %v347
      %v355 = vpack.c.b16 %v350, %v349
      %v356 = vpack.c.b16 %v352, %v351
      %vm361 = vcmask 523264
      %v363 = vsel %vm361, %v333, 0
      %v366 = vsel %vm361, %v334, 0
      %v369 = vsel %vm361, %v335, 0
      %v372 = vsel %vm361, %v336, 0
      %374 = vmatprep.subr.bf16.mxu0 0
      %375 = vmatpush1.bf16.msra.mxu0 %v353
      %376 = vmatprep.subr.bf16.mxu0 0
      %377 = vmatpush1.bf16.msra.mxu0 %v354
      %378 = vmatprep.subr.bf16.mxu0 0
      %379 = vmatpush1.bf16.msra.mxu0 %v355
      %380 = vmatprep.subr.bf16.mxu0 0
      %381 = vmatpush1.bf16.msra.mxu0 %v356
      %382 = vmatprep.subr.bf16.mxu0 0
      %383 = vmatpush1.bf16.msra.mxu0 0
      %384 = vmatprep.subr.bf16.mxu0 0
      %385 = vmatpush1.bf16.msra.mxu0 0
      %386 = vmatprep.subr.bf16.mxu0 0
      %387 = vmatpush1.bf16.msra.mxu0 0
      %388 = vmatprep.subr.bf16.mxu0 0
      %389 = vmatpush1.bf16.msra.mxu0 0
      %390 = vmatprep.subr.bf16.mxu0 0
      %391 = vmatpush1.bf16.msra.mxu0 0
      %392 = vmatprep.subr.bf16.mxu0 0
      %393 = vmatpush1.bf16.msra.mxu0 0
      %394 = vmatprep.subr.bf16.mxu0 0
      %395 = vmatpush1.bf16.msra.mxu0 0
      %396 = vmatprep.subr.bf16.mxu0 0
      %397 = vmatpush1.bf16.msra.mxu0 0
      %398 = vmatprep.subr.bf16.mxu0 0
      %399 = vmatpush1.bf16.msra.mxu0 0
      %400 = vmatprep.subr.bf16.mxu0 0
      %401 = vmatpush1.bf16.msra.mxu0 0
      %402 = vmatprep.subr.bf16.mxu0 0
      %403 = vmatpush1.bf16.msra.mxu0 0
      %404 = vmatprep.subr.bf16.mxu0 0
      %405 = vmatpush1.bf16.msra.mxu0 0
      %406 = vmatprep.mubr.bf16.mxu0 0
      %407 = vmatmul.mubr.bf16.gmra.mrb[0].mxu0 %v363
      %v408 = vpop.f32.mrb[0].mxu0
      %v409 = vadd.f32 0.0, %v408
      %v410 = vpop.f32.mrb[0].mxu0
      %v411 = vpop.f32.mrb[0].mxu0
      %v412 = vadd.f32 0.0, %v411
      %v413 = vpop.f32.mrb[0].mxu0
      %414 = vmatprep.mubr.bf16.mxu0 0
      %415 = vmatmul.mubr.bf16.gmra.mrb[0].mxu0 %v366
      %v416 = vpop.f32.mrb[0].mxu0
      %v417 = vadd.f32 0.0, %v416
      %v418 = vpop.f32.mrb[0].mxu0
      %v419 = vpop.f32.mrb[0].mxu0
      %v420 = vadd.f32 0.0, %v419
      %v421 = vpop.f32.mrb[0].mxu0
      %422 = vmatprep.mubr.bf16.mxu0 0
      %423 = vmatmul.mubr.bf16.gmra.mrb[0].mxu0 %v369
      %v424 = vpop.f32.mrb[0].mxu0
      %v425 = vadd.f32 0.0, %v424
      %v426 = vpop.f32.mrb[0].mxu0
      %v427 = vpop.f32.mrb[0].mxu0
      %v428 = vadd.f32 0.0, %v427
      %v429 = vpop.f32.mrb[0].mxu0
      %430 = vmatprep.mubr.bf16.mxu0 0
      %431 = vmatmul.mubr.bf16.gmra.mrb[0].mxu0 %v372
      %v432 = vpop.f32.mrb[0].mxu0
      %v433 = vadd.f32 0.0, %v432
      %v434 = vpop.f32.mrb[0].mxu0
      %v435 = vpop.f32.mrb[0].mxu0
      %v436 = vadd.f32 0.0, %v435
      %v437 = vpop.f32.mrb[0].mxu0
      %438 = vdwg.mxu0
      %v439 = vld [vmem:[%s287] sm:$0x1]
      %v441 = vlaneseq
      %v442 = vshrl.u32 %v441, 7
      %v443 = vsub.s32 0, %v442
      %v444 = vrot.slane %v439, %v443
      %v446 = vmul.f32 %v409, %v444
      %v447 = vmul.f32 %v412, %v444
      %v448 = vmul.f32 %v417, %v444
      %v449 = vmul.f32 %v420, %v444
      %v450 = vmul.f32 %v425, %v444
      %v451 = vmul.f32 %v428, %v444
      %v452 = vmul.f32 %v433, %v444
      %v453 = vmul.f32 %v436, %v444
      %v454 = vld [vmem:[%s290] sm:$0x1]
      %v456 = vlaneseq
      %v457 = vshrl.u32 %v456, 7
      %v458 = vsub.s32 0, %v457
      %v459 = vrot.slane %v454, %v458
      %v461 = vadd.f32 %v446, %v459
      %v462 = vadd.f32 %v447, %v459
      %v463 = vadd.f32 %v448, %v459
      %v464 = vadd.f32 %v449, %v459
      %v465 = vadd.f32 %v450, %v459
      %v466 = vadd.f32 %v451, %v459
      %v467 = vadd.f32 %v452, %v459
      %v468 = vadd.f32 %v453, %v459
      %v469 = vpack.c.bf16 %v462, %v461
      %v470 = vpack.c.bf16 %v464, %v463
      %v471 = vpack.c.bf16 %v466, %v465
      %v472 = vpack.c.bf16 %v468, %v467
      %v477 = vunpack.c.l.b16 %v469
      %v478 = vunpack.c.h.b16 %v469
      %v479 = vunpack.c.l.b16 %v470
      %v480 = vunpack.c.h.b16 %v470
      %v481 = vunpack.c.l.b16 %v471
      %v482 = vunpack.c.h.b16 %v471
      %v483 = vunpack.c.l.b16 %v472
      %v484 = vunpack.c.h.b16 %v472
      %v485 = vpack.c.b16 %v477, %v477
      %v486 = vpack.c.b16 %v478, %v478
      %v487 = vpack.c.b16 %v479, %v479
      %v488 = vpack.c.b16 %v480, %v480
      %v489 = vpack.c.b16 %v481, %v481
      %v490 = vpack.c.b16 %v482, %v482
      %v491 = vpack.c.b16 %v483, %v483
      %v492 = vpack.c.b16 %v484, %v484
      %vm501 = vcmask 60416
      %502 = vst.msk [vmem:[%s298] sm:$0xf] %vm501, %v485
      %503 = vst.msk [vmem:[%s298 + $0x4] sm:$0xf] %vm501, %v486
      %504 = vst.msk [vmem:[%s298 + $0x8] sm:$0xf] %vm501, %v487
      %505 = vst.msk [vmem:[%s298 + $0xc] sm:$0xf] %vm501, %v488
      %506 = vst.msk [vmem:[%s298 + $0x10] sm:$0xf] %vm501, %v489
      %507 = vst.msk [vmem:[%s298 + $0x14] sm:$0xf] %vm501, %v490
      %508 = vst.msk [vmem:[%s298 + $0x18] sm:$0xf] %vm501, %v491
      %509 = vst.msk [vmem:[%s298 + $0x1c] sm:$0xf] %vm501, %v492
      %s510 = smul.u32 8, %s20
      %p511 = scmp.lt.s32.totalorder %s510, 15
      %s512 = scalar_select %p511, %s510, 15
      %p513 = scmp.lt.s32.totalorder %s21, 0
      %s514 = scalar_select %p513, %s21, 0
      %s515 = sadd.s32 %s514, %s512
      %s516 = smul.addr %s515, 4
      %s517 = scalar_lea.vmem %s4, %s516
      // Predicated region
      $region37: #{unet_forward.6} parent=35 // pred_check
        %p518 = pneg %p162
      $region38: #{unet_forward.6} parent=35 // pred_check_branch
        %520 = sbr.rel (%p518) target = $region40
      $region39: #{unet_forward.6} parent=35 // pred_region
        %s521 = smul.u32 8, %s20
      $region40: #{unet_forward.6} parent=35 // pred_fallthru
        _
    $region36: #{unet_forward.6} parent=5 // pred_fallthru
      _
    %p522 = scmp.le.s32.totalorder 2, %s10
    // Predicated region
    $region41: #{unet_forward.6} parent=5 // pred_check
      %p523 = pneg %p522
    $region42: #{unet_forward.6} parent=5 // pred_check_branch
      %525 = sbr.rel (%p523) target = $region44
    $region43: #{unet_forward.6} parent=5 // pred_region
      %s526 = ssub.s32 %s10, 2
      // Predicated region
      $region45: #{unet_forward.6} parent=43 // pred_check
        %p527 = pneg %p168
      $region46: #{unet_forward.6} parent=43 // pred_check_branch
        %529 = sbr.rel (%p527) target = $region48
      $region47: #{unet_forward.6} parent=43 // pred_region
        %s530 = smul.u32 8, %s23
        %p531 = scmp.lt.s32.totalorder %s530, 15
        %s532 = scalar_select %p531, %s530, 15
        %p533 = scmp.lt.s32.totalorder %s24, 0
        %s534 = scalar_select %p533, %s24, 0
        %s535 = sadd.s32 %s534, %s532
        %s536 = smul.addr %s535, 4
        %s537 = scalar_lea.vmem %s4, %s536
      $region48: #{unet_forward.6} parent=43 // pred_fallthru
        _
    $region44: #{unet_forward.6} parent=5 // pred_fallthru
      _
  $region6: #{unet_forward.6} parent=0 // loop_footer
    %s14 = sadd.s32 1, %s10
  $region7: #{unet_forward.6} parent=0 // loop_footer_branch
    %9 = sbr.rel target = $region3
  $region8: #{unet_forward.6} parent=0 // loop_exit
    _

// kernel: unet_forward.7
$region0: #{unet_forward.7}
  #allocation0 [shape = 'u32[]', space=smem, size = 0x4, offset = 0x4, fixed_abs, tag = 'smem constant byte address 0x4 - core index']
  #allocation1 [shape = 'u32[144,128]{1,0:T(1,128)}', space=vmem, size = 0x12000, scoped, tag = 'internal scratch']
  %s0 = inlined_call_operand.vmem [shape: bf16[32,128], index: 0, kind: input, shape index: {}]
  %s1 = inlined_call_operand.vmem [shape: bf16[128,16], index: 1, kind: input, shape index: {}]
  %s2 = inlined_call_operand.vmem [shape: f32[1,16], index: 2, kind: input, shape index: {}]
  %s3 = inlined_call_operand.vmem [shape: f32[1,16], index: 3, kind: input, shape index: {}]
  %s4 = inlined_call_operand.vmem [shape: bf16[32,16], index: 4, kind: output, shape index: {}]
  %s5 = sld [smem:[#allocation0]]
  $region26: #{unet_forward.7} parent=0
    _
  %s7 = ssub.s32 1, %s5
  %s8 = scalar_select 0, %s7, %s5
  // Predicated region
  $region2: #{unet_forward.7} parent=0 // pred_check
    _
  $region3: #{unet_forward.7} parent=0 // pred_check_branch
    %10 = sbr.rel (0) target = $region5
  $region4: #{unet_forward.7} parent=0 // pred_region
    _
  $region5: #{unet_forward.7} parent=0 // pred_fallthru
    _
  // Predicated region
  $region6: #{unet_forward.7} parent=0 // pred_check
    _
  $region7: #{unet_forward.7} parent=0 // pred_check_branch
    %12 = sbr.rel (0) target = $region9
  $region8: #{unet_forward.7} parent=0 // pred_region
    _
  $region9: #{unet_forward.7} parent=0 // pred_fallthru
    _
  // Predicated region
  $region10: #{unet_forward.7} parent=0 // pred_check
    _
  $region11: #{unet_forward.7} parent=0 // pred_check_branch
    %14 = sbr.rel (0) target = $region13
  $region12: #{unet_forward.7} parent=0 // pred_region
    _
  $region13: #{unet_forward.7} parent=0 // pred_fallthru
    _
  // Predicated region
  $region14: #{unet_forward.7} parent=0 // pred_check
    _
  $region15: #{unet_forward.7} parent=0 // pred_check_branch
    %16 = sbr.rel (0) target = $region17
  $region16: #{unet_forward.7} parent=0 // pred_region
    _
  $region17: #{unet_forward.7} parent=0 // pred_fallthru
    _
  %v19 = vld [vmem:[%s0] sm:$0xf]
  %v20 = vld [vmem:[%s0 + $0x4] sm:$0xf]
  %v21 = vld [vmem:[%s0 + $0x8] sm:$0xf]
  %v22 = vld [vmem:[%s0 + $0xc] sm:$0xf]
  %vm23 = vcmp.gt.bf16.partialorder %v19, 0
  %vm24 = vcmp.gt.bf16.partialorder %v20, 0
  %vm25 = vcmp.gt.bf16.partialorder %v21, 0
  %vm26 = vcmp.gt.bf16.partialorder %v22, 0
  %v27 = vmul.bf16 %v19, 1045249613
  %v28 = vmul.bf16 %v20, 1045249613
  %v29 = vmul.bf16 %v21, 1045249613
  %v30 = vmul.bf16 %v22, 1045249613
  %v31 = vsel %vm23, %v19, %v27
  %v32 = vsel %vm24, %v20, %v28
  %v33 = vsel %vm25, %v21, %v29
  %v34 = vsel %vm26, %v22, %v30
  %v35 = vld [vmem:[%s1] sm:$0xf]
  %v36 = vld [vmem:[%s1 + $0x4] sm:$0xf]
  %v37 = vld [vmem:[%s1 + $0x8] sm:$0xf]
  %v38 = vld [vmem:[%s1 + $0xc] sm:$0xf]
  %v39 = vld [vmem:[%s1 + $0x10] sm:$0xf]
  %v40 = vld [vmem:[%s1 + $0x14] sm:$0xf]
  %v41 = vld [vmem:[%s1 + $0x18] sm:$0xf]
  %v42 = vld [vmem:[%s1 + $0x1c] sm:$0xf]
  %v43 = vld [vmem:[%s1 + $0x20] sm:$0xf]
  %v44 = vld [vmem:[%s1 + $0x24] sm:$0xf]
  %v45 = vld [vmem:[%s1 + $0x28] sm:$0xf]
  %v46 = vld [vmem:[%s1 + $0x2c] sm:$0xf]
  %v47 = vld [vmem:[%s1 + $0x30] sm:$0xf]
  %v48 = vld [vmem:[%s1 + $0x34] sm:$0xf]
  %v49 = vld [vmem:[%s1 + $0x38] sm:$0xf]
  %v50 = vld [vmem:[%s1 + $0x3c] sm:$0xf]
  %v55 = vunpack.c.l.b16 %v31
  %v56 = vunpack.c.l.b16 %v32
  %v57 = vunpack.c.l.b16 %v33
  %v58 = vunpack.c.l.b16 %v34
  %v59 = vpack.c.b16 %v56, %v55
  %v60 = vpack.c.b16 %v58, %v57
  %v79 = vunpack.c.l.b16 %v35
  %v80 = vunpack.c.l.b16 %v36
  %v81 = vunpack.c.l.b16 %v37
  %v82 = vunpack.c.l.b16 %v38
  %v83 = vunpack.c.l.b16 %v39
  %v84 = vunpack.c.l.b16 %v40
  %v85 = vunpack.c.l.b16 %v41
  %v86 = vunpack.c.l.b16 %v42
  %v87 = vunpack.c.l.b16 %v43
  %v88 = vunpack.c.l.b16 %v44
  %v89 = vunpack.c.l.b16 %v45
  %v90 = vunpack.c.l.b16 %v46
  %v91 = vunpack.c.l.b16 %v47
  %v92 = vunpack.c.l.b16 %v48
  %v93 = vunpack.c.l.b16 %v49
  %v94 = vunpack.c.l.b16 %v50
  %v95 = vpack.c.b16 %v80, %v79
  %v96 = vpack.c.b16 %v82, %v81
  %v97 = vpack.c.b16 %v84, %v83
  %v98 = vpack.c.b16 %v86, %v85
  %v99 = vpack.c.b16 %v88, %v87
  %v100 = vpack.c.b16 %v90, %v89
  %v101 = vpack.c.b16 %v92, %v91
  %v102 = vpack.c.b16 %v94, %v93
  %111 = vmatprep.subr.bf16.mxu0 0
  %112 = vmatpush1.bf16.msra.mxu0 %v95
  %113 = vmatprep.subr.bf16.mxu0 0
  %114 = vmatpush1.bf16.msra.mxu0 %v96
  %115 = vmatprep.subr.bf16.mxu0 0
  %116 = vmatpush1.bf16.msra.mxu0 %v97
  %117 = vmatprep.subr.bf16.mxu0 0
  %118 = vmatpush1.bf16.msra.mxu0 %v98
  %119 = vmatprep.subr.bf16.mxu0 0
  %120 = vmatpush1.bf16.msra.mxu0 %v99
  %121 = vmatprep.subr.bf16.mxu0 0
  %122 = vmatpush1.bf16.msra.mxu0 %v100
  %123 = vmatprep.subr.bf16.mxu0 0
  %124 = vmatpush1.bf16.msra.mxu0 %v101
  %125 = vmatprep.subr.bf16.mxu0 0
  %126 = vmatpush1.bf16.msra.mxu0 %v102
  %127 = vmatprep.subr.bf16.mxu0 0
  %128 = vmatpush1.bf16.msra.mxu0 0
  %129 = vmatprep.subr.bf16.mxu0 0
  %130 = vmatpush1.bf16.msra.mxu0 0
  %131 = vmatprep.subr.bf16.mxu0 0
  %132 = vmatpush1.bf16.msra.mxu0 0
  %133 = vmatprep.subr.bf16.mxu0 0
  %134 = vmatpush1.bf16.msra.mxu0 0
  %135 = vmatprep.subr.bf16.mxu0 0
  %136 = vmatpush1.bf16.msra.mxu0 0
  %137 = vmatprep.subr.bf16.mxu0 0
  %138 = vmatpush1.bf16.msra.mxu0 0
  %139 = vmatprep.subr.bf16.mxu0 0
  %140 = vmatpush1.bf16.msra.mxu0 0
  %141 = vmatprep.subr.bf16.mxu0 0
  %142 = vmatpush1.bf16.msra.mxu0 0
  %143 = vmatprep.mubr.bf16.mxu0 0
  %144 = vmatmul.mubr.bf16.gmra.mrb[0].mxu0 %v59
  %v145 = vpop.f32.mrb[0].mxu0
  %v146 = vadd.f32 0.0, %v145
  %v147 = vpop.f32.mrb[0].mxu0
  %v148 = vpop.f32.mrb[0].mxu0
  %v149 = vadd.f32 0.0, %v148
  %v150 = vpop.f32.mrb[0].mxu0
  %151 = vmatprep.mubr.bf16.mxu0 0
  %152 = vmatmul.mubr.bf16.gmra.mrb[0].mxu0 %v60
  %v153 = vpop.f32.mrb[0].mxu0
  %v154 = vadd.f32 0.0, %v153
  %v155 = vpop.f32.mrb[0].mxu0
  %v156 = vpop.f32.mrb[0].mxu0
  %v157 = vadd.f32 0.0, %v156
  %v158 = vpop.f32.mrb[0].mxu0
  %159 = vdwg.mxu0
  %v160 = vld [vmem:[%s2] sm:$0x1]
  %v162 = vlaneseq
  %v163 = vshrl.u32 %v162, 7
  %v164 = vsub.s32 0, %v163
  %v165 = vrot.slane %v160, %v164
  %v167 = vmul.f32 %v146, %v165
  %v168 = vmul.f32 %v149, %v165
  %v169 = vmul.f32 %v154, %v165
  %v170 = vmul.f32 %v157, %v165
  %v171 = vld [vmem:[%s3] sm:$0x1]
  %v173 = vlaneseq
  %v174 = vshrl.u32 %v173, 7
  %v175 = vsub.s32 0, %v174
  %v176 = vrot.slane %v171, %v175
  %v178 = vadd.f32 %v167, %v176
  %v179 = vadd.f32 %v168, %v176
  %v180 = vadd.f32 %v169, %v176
  %v181 = vadd.f32 %v170, %v176
  %v182 = vpack.c.bf16 %v179, %v178
  %v183 = vpack.c.bf16 %v181, %v180
  %v186 = vunpack.c.l.b16 %v182
  %v187 = vunpack.c.h.b16 %v182
  %v188 = vunpack.c.l.b16 %v183
  %v189 = vunpack.c.h.b16 %v183
  %v190 = vpack.c.b16 %v186, %v186
  %v191 = vpack.c.b16 %v187, %v187
  %v192 = vpack.c.b16 %v188, %v188
  %v193 = vpack.c.b16 %v189, %v189
  %vm198 = vcmask 125952
  %199 = vst.msk [vmem:[%s4] sm:$0xf] %vm198, %v190
  %200 = vst.msk [vmem:[%s4 + $0x4] sm:$0xf] %vm198, %v191
  %201 = vst.msk [vmem:[%s4 + $0x8] sm:$0xf] %vm198, %v192
  %202 = vst.msk [vmem:[%s4 + $0xc] sm:$0xf] %vm198, %v193
  // Predicated region
  $region18: #{unet_forward.7} parent=0 // pred_check
    _
  $region19: #{unet_forward.7} parent=0 // pred_check_branch
    %204 = sbr.rel (0) target = $region21
  $region20: #{unet_forward.7} parent=0 // pred_region
    _
  $region21: #{unet_forward.7} parent=0 // pred_fallthru
    _
  // Predicated region
  $region22: #{unet_forward.7} parent=0 // pred_check
    _
  $region23: #{unet_forward.7} parent=0 // pred_check_branch
    %206 = sbr.rel (0) target = $region25
  $region24: #{unet_forward.7} parent=0 // pred_region
    _
  $region25: #{unet_forward.7} parent=0 // pred_fallthru
    _

// kernel: unet_forward.8
$region0: #{unet_forward.8}
  #allocation0 [shape = 'u32[]', space=smem, size = 0x4, offset = 0x4, fixed_abs, tag = 'smem constant byte address 0x4 - core index']
  #allocation1 [shape = 'u32[144,128]{1,0:T(1,128)}', space=vmem, size = 0x12000, scoped, tag = 'internal scratch']
  %s0 = inlined_call_operand.vmem [shape: bf16[8,256], index: 0, kind: input, shape index: {}]
  %s1 = inlined_call_operand.vmem [shape: bf16[256,32], index: 1, kind: input, shape index: {}]
  %s2 = inlined_call_operand.vmem [shape: f32[1,32], index: 2, kind: input, shape index: {}]
  %s3 = inlined_call_operand.vmem [shape: f32[1,32], index: 3, kind: input, shape index: {}]
  %s4 = inlined_call_operand.vmem [shape: bf16[8,32], index: 4, kind: output, shape index: {}]
  %s5 = sld [smem:[#allocation0]]
  $region26: #{unet_forward.8} parent=0
    _
  %s7 = ssub.s32 1, %s5
  %s8 = scalar_select 0, %s7, %s5
  // Predicated region
  $region2: #{unet_forward.8} parent=0 // pred_check
    _
  $region3: #{unet_forward.8} parent=0 // pred_check_branch
    %10 = sbr.rel (0) target = $region5
  $region4: #{unet_forward.8} parent=0 // pred_region
    _
  $region5: #{unet_forward.8} parent=0 // pred_fallthru
    _
  // Predicated region
  $region6: #{unet_forward.8} parent=0 // pred_check
    _
  $region7: #{unet_forward.8} parent=0 // pred_check_branch
    %12 = sbr.rel (0) target = $region9
  $region8: #{unet_forward.8} parent=0 // pred_region
    _
  $region9: #{unet_forward.8} parent=0 // pred_fallthru
    _
  // Predicated region
  $region10: #{unet_forward.8} parent=0 // pred_check
    _
  $region11: #{unet_forward.8} parent=0 // pred_check_branch
    %14 = sbr.rel (0) target = $region13
  $region12: #{unet_forward.8} parent=0 // pred_region
    _
  $region13: #{unet_forward.8} parent=0 // pred_fallthru
    _
  // Predicated region
  $region14: #{unet_forward.8} parent=0 // pred_check
    _
  $region15: #{unet_forward.8} parent=0 // pred_check_branch
    %16 = sbr.rel (0) target = $region17
  $region16: #{unet_forward.8} parent=0 // pred_region
    _
  $region17: #{unet_forward.8} parent=0 // pred_fallthru
    _
  %v19 = vld [vmem:[%s0] sm:$0xff]
  %vm20 = vcmp.gt.bf16.partialorder %v19, 0
  %v21 = vmul.bf16 %v19, 1045249613
  %v22 = vsel %vm20, %v19, %v21
  %v23 = vld [vmem:[%s1] sm:$0xf]
  %v24 = vld [vmem:[%s1 + $0x4] sm:$0xf]
  %v25 = vld [vmem:[%s1 + $0x8] sm:$0xf]
  %v26 = vld [vmem:[%s1 + $0xc] sm:$0xf]
  %v27 = vld [vmem:[%s1 + $0x10] sm:$0xf]
  %v28 = vld [vmem:[%s1 + $0x14] sm:$0xf]
  %v29 = vld [vmem:[%s1 + $0x18] sm:$0xf]
  %v30 = vld [vmem:[%s1 + $0x1c] sm:$0xf]
  %v31 = vld [vmem:[%s1 + $0x20] sm:$0xf]
  %v32 = vld [vmem:[%s1 + $0x24] sm:$0xf]
  %v33 = vld [vmem:[%s1 + $0x28] sm:$0xf]
  %v34 = vld [vmem:[%s1 + $0x2c] sm:$0xf]
  %v35 = vld [vmem:[%s1 + $0x30] sm:$0xf]
  %v36 = vld [vmem:[%s1 + $0x34] sm:$0xf]
  %v37 = vld [vmem:[%s1 + $0x38] sm:$0xf]
  %v38 = vld [vmem:[%s1 + $0x3c] sm:$0xf]
  %v39 = vld [vmem:[%s1 + $0x40] sm:$0xf]
  %v40 = vld [vmem:[%s1 + $0x44] sm:$0xf]
  %v41 = vld [vmem:[%s1 + $0x48] sm:$0xf]
  %v42 = vld [vmem:[%s1 + $0x4c] sm:$0xf]
  %v43 = vld [vmem:[%s1 + $0x50] sm:$0xf]
  %v44 = vld [vmem:[%s1 + $0x54] sm:$0xf]
  %v45 = vld [vmem:[%s1 + $0x58] sm:$0xf]
  %v46 = vld [vmem:[%s1 + $0x5c] sm:$0xf]
  %v47 = vld [vmem:[%s1 + $0x60] sm:$0xf]
  %v48 = vld [vmem:[%s1 + $0x64] sm:$0xf]
  %v49 = vld [vmem:[%s1 + $0x68] sm:$0xf]
  %v50 = vld [vmem:[%s1 + $0x6c] sm:$0xf]
  %v51 = vld [vmem:[%s1 + $0x70] sm:$0xf]
  %v52 = vld [vmem:[%s1 + $0x74] sm:$0xf]
  %v53 = vld [vmem:[%s1 + $0x78] sm:$0xf]
  %v54 = vld [vmem:[%s1 + $0x7c] sm:$0xf]
  %v56 = vunpack.c.l.b16 %v22
  %v57 = vunpack.c.h.b16 %v22
  %v58 = vpack.c.b16 %v56, %v56
  %v59 = vpack.c.b16 %v57, %v57
  %v94 = vunpack.c.l.b16 %v23
  %v95 = vunpack.c.l.b16 %v24
  %v96 = vunpack.c.l.b16 %v25
  %v97 = vunpack.c.l.b16 %v26
  %v98 = vunpack.c.l.b16 %v27
  %v99 = vunpack.c.l.b16 %v28
  %v100 = vunpack.c.l.b16 %v29
  %v101 = vunpack.c.l.b16 %v30
  %v102 = vunpack.c.l.b16 %v31
  %v103 = vunpack.c.l.b16 %v32
  %v104 = vunpack.c.l.b16 %v33
  %v105 = vunpack.c.l.b16 %v34
  %v106 = vunpack.c.l.b16 %v35
  %v107 = vunpack.c.l.b16 %v36
  %v108 = vunpack.c.l.b16 %v37
  %v109 = vunpack.c.l.b16 %v38
  %v110 = vunpack.c.l.b16 %v39
  %v111 = vunpack.c.l.b16 %v40
  %v112 = vunpack.c.l.b16 %v41
  %v113 = vunpack.c.l.b16 %v42
  %v114 = vunpack.c.l.b16 %v43
  %v115 = vunpack.c.l.b16 %v44
  %v116 = vunpack.c.l.b16 %v45
  %v117 = vunpack.c.l.b16 %v46
  %v118 = vunpack.c.l.b16 %v47
  %v119 = vunpack.c.l.b16 %v48
  %v120 = vunpack.c.l.b16 %v49
  %v121 = vunpack.c.l.b16 %v50
  %v122 = vunpack.c.l.b16 %v51
  %v123 = vunpack.c.l.b16 %v52
  %v124 = vunpack.c.l.b16 %v53
  %v125 = vunpack.c.l.b16 %v54
  %v126 = vpack.c.b16 %v95, %v94
  %v127 = vpack.c.b16 %v97, %v96
  %v128 = vpack.c.b16 %v99, %v98
  %v129 = vpack.c.b16 %v101, %v100
  %v130 = vpack.c.b16 %v103, %v102
  %v131 = vpack.c.b16 %v105, %v104
  %v132 = vpack.c.b16 %v107, %v106
  %v133 = vpack.c.b16 %v109, %v108
  %v134 = vpack.c.b16 %v111, %v110
  %v135 = vpack.c.b16 %v113, %v112
  %v136 = vpack.c.b16 %v115, %v114
  %v137 = vpack.c.b16 %v117, %v116
  %v138 = vpack.c.b16 %v119, %v118
  %v139 = vpack.c.b16 %v121, %v120
  %v140 = vpack.c.b16 %v123, %v122
  %v141 = vpack.c.b16 %v125, %v124
  %158 = vmatprep.subr.bf16.mxu0 0
  %159 = vmatpush1.bf16.msra.mxu0 %v126
  %160 = vmatprep.subr.bf16.mxu0 0
  %161 = vmatpush1.bf16.msra.mxu0 %v127
  %162 = vmatprep.subr.bf16.mxu0 0
  %163 = vmatpush1.bf16.msra.mxu0 %v128
  %164 = vmatprep.subr.bf16.mxu0 0
  %165 = vmatpush1.bf16.msra.mxu0 %v129
  %166 = vmatprep.subr.bf16.mxu0 0
  %167 = vmatpush1.bf16.msra.mxu0 %v130
  %168 = vmatprep.subr.bf16.mxu0 0
  %169 = vmatpush1.bf16.msra.mxu0 %v131
  %170 = vmatprep.subr.bf16.mxu0 0
  %171 = vmatpush1.bf16.msra.mxu0 %v132
  %172 = vmatprep.subr.bf16.mxu0 0
  %173 = vmatpush1.bf16.msra.mxu0 %v133
  %174 = vmatprep.subr.bf16.mxu0 0
  %175 = vmatpush1.bf16.msra.mxu0 %v134
  %176 = vmatprep.subr.bf16.mxu0 0
  %177 = vmatpush1.bf16.msra.mxu0 %v135
  %178 = vmatprep.subr.bf16.mxu0 0
  %179 = vmatpush1.bf16.msra.mxu0 %v136
  %180 = vmatprep.subr.bf16.mxu0 0
  %181 = vmatpush1.bf16.msra.mxu0 %v137
  %182 = vmatprep.subr.bf16.mxu0 0
  %183 = vmatpush1.bf16.msra.mxu0 %v138
  %184 = vmatprep.subr.bf16.mxu0 0
  %185 = vmatpush1.bf16.msra.mxu0 %v139
  %186 = vmatprep.subr.bf16.mxu0 0
  %187 = vmatpush1.bf16.msra.mxu0 %v140
  %188 = vmatprep.subr.bf16.mxu0 0
  %189 = vmatpush1.bf16.msra.mxu0 %v141
  %190 = vmatprep.mubr.bf16.mxu0 %v59
  %191 = vmatmul.mubr.bf16.gmra.mrb[0].mxu0 %v58
  %v192 = vpop.f32.mrb[0].mxu0
  %v193 = vadd.f32 0.0, %v192
  %v194 = vpop.f32.mrb[0].mxu0
  %v195 = vpop.f32.mrb[0].mxu0
  %v196 = vpop.f32.mrb[0].mxu0
  %197 = vdwg.mxu0
  %v198 = vld [vmem:[%s2] sm:$0x1]
  %v200 = vlaneseq
  %v201 = vshrl.u32 %v200, 7
  %v202 = vsub.s32 0, %v201
  %v203 = vrot.slane %v198, %v202
  %v205 = vmul.f32 %v193, %v203
  %v206 = vld [vmem:[%s3] sm:$0x1]
  %v208 = vlaneseq
  %v209 = vshrl.u32 %v208, 7
  %v210 = vsub.s32 0, %v209
  %v211 = vrot.slane %v206, %v210
  %v213 = vadd.f32 %v205, %v211
  %v214 = vpack.c.bf16 %v213, %v213
  %vm215 = vcmask 257024
  %216 = vst.msk [vmem:[%s4] sm:$0xf] %vm215, %v214
  // Predicated region
  $region18: #{unet_forward.8} parent=0 // pred_check
    _
  $region19: #{unet_forward.8} parent=0 // pred_check_branch
    %218 = sbr.rel (0) target = $region21
  $region20: #{unet_forward.8} parent=0 // pred_region
    _
  $region21: #{unet_forward.8} parent=0 // pred_fallthru
    _
  // Predicated region
  $region22: #{unet_forward.8} parent=0 // pred_check
    _
  $region23: #{unet_forward.8} parent=0 // pred_check_branch
    %220 = sbr.rel (0) target = $region25
  $region24: #{unet_forward.8} parent=0 // pred_region
    _
  $region25: #{unet_forward.8} parent=0 // pred_fallthru
    _

// kernel: unet_forward.9
$region0: #{unet_forward.9}
  #allocation0 [shape = 'u32[]', space=smem, size = 0x4, offset = 0x4, fixed_abs, tag = 'smem constant byte address 0x4 - core index']
  #allocation1 [shape = 'u32[144,128]{1,0:T(1,128)}', space=vmem, size = 0x12000, scoped, tag = 'internal scratch']
  %s0 = inlined_call_operand.vmem [shape: bf16[8,288], index: 0, kind: input, shape index: {}]
  %s1 = inlined_call_operand.vmem [shape: bf16[288,64], index: 1, kind: input, shape index: {}]
  %s2 = inlined_call_operand.vmem [shape: f32[1,64], index: 2, kind: input, shape index: {}]
  %s3 = inlined_call_operand.vmem [shape: f32[1,64], index: 3, kind: input, shape index: {}]
  %s4 = inlined_call_operand.vmem [shape: bf16[8,64], index: 4, kind: output, shape index: {}]
  %s5 = sld [smem:[#allocation0]]
  $region26: #{unet_forward.9} parent=0
    _
  %s7 = ssub.s32 1, %s5
  %s8 = scalar_select 0, %s7, %s5
  // Predicated region
  $region2: #{unet_forward.9} parent=0 // pred_check
    _
  $region3: #{unet_forward.9} parent=0 // pred_check_branch
    %10 = sbr.rel (0) target = $region5
  $region4: #{unet_forward.9} parent=0 // pred_region
    _
  $region5: #{unet_forward.9} parent=0 // pred_fallthru
    _
  // Predicated region
  $region6: #{unet_forward.9} parent=0 // pred_check
    _
  $region7: #{unet_forward.9} parent=0 // pred_check_branch
    %12 = sbr.rel (0) target = $region9
  $region8: #{unet_forward.9} parent=0 // pred_region
    _
  $region9: #{unet_forward.9} parent=0 // pred_fallthru
    _
  // Predicated region
  $region10: #{unet_forward.9} parent=0 // pred_check
    _
  $region11: #{unet_forward.9} parent=0 // pred_check_branch
    %14 = sbr.rel (0) target = $region13
  $region12: #{unet_forward.9} parent=0 // pred_region
    _
  $region13: #{unet_forward.9} parent=0 // pred_fallthru
    _
  // Predicated region
  $region14: #{unet_forward.9} parent=0 // pred_check
    _
  $region15: #{unet_forward.9} parent=0 // pred_check_branch
    %16 = sbr.rel (0) target = $region17
  $region16: #{unet_forward.9} parent=0 // pred_region
    _
  $region17: #{unet_forward.9} parent=0 // pred_fallthru
    _
  %v18 = vld [vmem:[%s0] sm:$0xff]
  %v19 = vld [vmem:[%s0 + $0x8] sm:$0xf]
  %v20 = vmax.bf16 %v18, 0
  %v21 = vmax.bf16 %v19, 0
  %v22 = vld [vmem:[%s1] sm:$0xf]
  %v23 = vld [vmem:[%s1 + $0x4] sm:$0xf]
  %v24 = vld [vmem:[%s1 + $0x8] sm:$0xf]
  %v25 = vld [vmem:[%s1 + $0xc] sm:$0xf]
  %v26 = vld [vmem:[%s1 + $0x10] sm:$0xf]
  %v27 = vld [vmem:[%s1 + $0x14] sm:$0xf]
  %v28 = vld [vmem:[%s1 + $0x18] sm:$0xf]
  %v29 = vld [vmem:[%s1 + $0x1c] sm:$0xf]
  %v30 = vld [vmem:[%s1 + $0x20] sm:$0xf]
  %v31 = vld [vmem:[%s1 + $0x24] sm:$0xf]
  %v32 = vld [vmem:[%s1 + $0x28] sm:$0xf]
  %v33 = vld [vmem:[%s1 + $0x2c] sm:$0xf]
  %v34 = vld [vmem:[%s1 + $0x30] sm:$0xf]
  %v35 = vld [vmem:[%s1 + $0x34] sm:$0xf]
  %v36 = vld [vmem:[%s1 + $0x38] sm:$0xf]
  %v37 = vld [vmem:[%s1 + $0x3c] sm:$0xf]
  %v38 = vld [vmem:[%s1 + $0x40] sm:$0xf]
  %v39 = vld [vmem:[%s1 + $0x44] sm:$0xf]
  %v40 = vld [vmem:[%s1 + $0x48] sm:$0xf]
  %v41 = vld [vmem:[%s1 + $0x4c] sm:$0xf]
  %v42 = vld [vmem:[%s1 + $0x50] sm:$0xf]
  %v43 = vld [vmem:[%s1 + $0x54] sm:$0xf]
  %v44 = vld [vmem:[%s1 + $0x58] sm:$0xf]
  %v45 = vld [vmem:[%s1 + $0x5c] sm:$0xf]
  %v46 = vld [vmem:[%s1 + $0x60] sm:$0xf]
  %v47 = vld [vmem:[%s1 + $0x64] sm:$0xf]
  %v48 = vld [vmem:[%s1 + $0x68] sm:$0xf]
  %v49 = vld [vmem:[%s1 + $0x6c] sm:$0xf]
  %v50 = vld [vmem:[%s1 + $0x70] sm:$0xf]
  %v51 = vld [vmem:[%s1 + $0x74] sm:$0xf]
  %v52 = vld [vmem:[%s1 + $0x78] sm:$0xf]
  %v53 = vld [vmem:[%s1 + $0x7c] sm:$0xf]
  %v54 = vld [vmem:[%s1 + $0x80] sm:$0xf]
  %v55 = vld [vmem:[%s1 + $0x84] sm:$0xf]
  %v56 = vld [vmem:[%s1 + $0x88] sm:$0xf]
  %v57 = vld [vmem:[%s1 + $0x8c] sm:$0xf]
  %v60 = vunpack.c.l.b16 %v20
  %v61 = vunpack.c.h.b16 %v20
  %v62 = vunpack.c.l.b16 %v21
  %v63 = vpack.c.b16 %v60, %v60
  %v64 = vpack.c.b16 %v61, %v61
  %v65 = vpack.c.b16 %v62, %v62
  %v104 = vunpack.c.l.b16 %v22
  %v105 = vunpack.c.l.b16 %v23
  %v106 = vunpack.c.l.b16 %v24
  %v107 = vunpack.c.l.b16 %v25
  %v108 = vunpack.c.l.b16 %v26
  %v109 = vunpack.c.l.b16 %v27
  %v110 = vunpack.c.l.b16 %v28
  %v111 = vunpack.c.l.b16 %v29
  %v112 = vunpack.c.l.b16 %v30
  %v113 = vunpack.c.l.b16 %v31
  %v114 = vunpack.c.l.b16 %v32
  %v115 = vunpack.c.l.b16 %v33
  %v116 = vunpack.c.l.b16 %v34
  %v117 = vunpack.c.l.b16 %v35
  %v118 = vunpack.c.l.b16 %v36
  %v119 = vunpack.c.l.b16 %v37
  %v120 = vunpack.c.l.b16 %v38
  %v121 = vunpack.c.l.b16 %v39
  %v122 = vunpack.c.l.b16 %v40
  %v123 = vunpack.c.l.b16 %v41
  %v124 = vunpack.c.l.b16 %v42
  %v125 = vunpack.c.l.b16 %v43
  %v126 = vunpack.c.l.b16 %v44
  %v127 = vunpack.c.l.b16 %v45
  %v128 = vunpack.c.l.b16 %v46
  %v129 = vunpack.c.l.b16 %v47
  %v130 = vunpack.c.l.b16 %v48
  %v131 = vunpack.c.l.b16 %v49
  %v132 = vunpack.c.l.b16 %v50
  %v133 = vunpack.c.l.b16 %v51
  %v134 = vunpack.c.l.b16 %v52
  %v135 = vunpack.c.l.b16 %v53
  %v136 = vunpack.c.l.b16 %v54
  %v137 = vunpack.c.l.b16 %v55
  %v138 = vunpack.c.l.b16 %v56
  %v139 = vunpack.c.l.b16 %v57
  %v140 = vpack.c.b16 %v105, %v104
  %v141 = vpack.c.b16 %v107, %v106
  %v142 = vpack.c.b16 %v109, %v108
  %v143 = vpack.c.b16 %v111, %v110
  %v144 = vpack.c.b16 %v113, %v112
  %v145 = vpack.c.b16 %v115, %v114
  %v146 = vpack.c.b16 %v117, %v116
  %v147 = vpack.c.b16 %v119, %v118
  %v148 = vpack.c.b16 %v121, %v120
  %v149 = vpack.c.b16 %v123, %v122
  %v150 = vpack.c.b16 %v125, %v124
  %v151 = vpack.c.b16 %v127, %v126
  %v152 = vpack.c.b16 %v129, %v128
  %v153 = vpack.c.b16 %v131, %v130
  %v154 = vpack.c.b16 %v133, %v132
  %v155 = vpack.c.b16 %v135, %v134
  %v156 = vpack.c.b16 %v137, %v136
  %v157 = vpack.c.b16 %v139, %v138
  %vm176 = vcmask 261120
  %v178 = vsel %vm176, %v65, 0
  %180 = vmatprep.subr.bf16.mxu0 0
  %181 = vmatpush1.bf16.msra.mxu0 %v140
  %182 = vmatprep.subr.bf16.mxu0 0
  %183 = vmatpush1.bf16.msra.mxu0 %v141
  %184 = vmatprep.subr.bf16.mxu0 0
  %185 = vmatpush1.bf16.msra.mxu0 %v142
  %186 = vmatprep.subr.bf16.mxu0 0
  %187 = vmatpush1.bf16.msra.mxu0 %v143
  %188 = vmatprep.subr.bf16.mxu0 0
  %189 = vmatpush1.bf16.msra.mxu0 %v144
  %190 = vmatprep.subr.bf16.mxu0 0
  %191 = vmatpush1.bf16.msra.mxu0 %v145
  %192 = vmatprep.subr.bf16.mxu0 0
  %193 = vmatpush1.bf16.msra.mxu0 %v146
  %194 = vmatprep.subr.bf16.mxu0 0
  %195 = vmatpush1.bf16.msra.mxu0 %v147
  %196 = vmatprep.subr.bf16.mxu0 0
  %197 = vmatpush1.bf16.msra.mxu0 %v148
  %198 = vmatprep.subr.bf16.mxu0 0
  %199 = vmatpush1.bf16.msra.mxu0 %v149
  %200 = vmatprep.subr.bf16.mxu0 0
  %201 = vmatpush1.bf16.msra.mxu0 %v150
  %202 = vmatprep.subr.bf16.mxu0 0
  %203 = vmatpush1.bf16.msra.mxu0 %v151
  %204 = vmatprep.subr.bf16.mxu0 0
  %205 = vmatpush1.bf16.msra.mxu0 %v152
  %206 = vmatprep.subr.bf16.mxu0 0
  %207 = vmatpush1.bf16.msra.mxu0 %v153
  %208 = vmatprep.subr.bf16.mxu0 0
  %209 = vmatpush1.bf16.msra.mxu0 %v154
  %210 = vmatprep.subr.bf16.mxu0 0
  %211 = vmatpush1.bf16.msra.mxu0 %v155
  %212 = vmatprep.mubr.bf16.mxu0 %v64
  %213 = vmatmul.mubr.bf16.gmra.mrb[0].mxu0 %v63
  %v214 = vpop.f32.mrb[0].mxu0
  %v215 = vadd.f32 0.0, %v214
  %v216 = vpop.f32.mrb[0].mxu0
  %v217 = vpop.f32.mrb[0].mxu0
  %v218 = vpop.f32.mrb[0].mxu0
  %219 = vdwg.mxu0
  %220 = vmatprep.subr.bf16.mxu0 0
  %221 = vmatpush1.bf16.msra.mxu0 %v156
  %222 = vmatprep.subr.bf16.mxu0 0
  %223 = vmatpush1.bf16.msra.mxu0 %v157
  %224 = vmatprep.subr.bf16.mxu0 0
  %225 = vmatpush1.bf16.msra.mxu0 0
  %226 = vmatprep.subr.bf16.mxu0 0
  %227 = vmatpush1.bf16.msra.mxu0 0
  %228 = vmatprep.subr.bf16.mxu0 0
  %229 = vmatpush1.bf16.msra.mxu0 0
  %230 = vmatprep.subr.bf16.mxu0 0
  %231 = vmatpush1.bf16.msra.mxu0 0
  %232 = vmatprep.subr.bf16.mxu0 0
  %233 = vmatpush1.bf16.msra.mxu0 0
  %234 = vmatprep.subr.bf16.mxu0 0
  %235 = vmatpush1.bf16.msra.mxu0 0
  %236 = vmatprep.subr.bf16.mxu0 0
  %237 = vmatpush1.bf16.msra.mxu0 0
  %238 = vmatprep.subr.bf16.mxu0 0
  %239 = vmatpush1.bf16.msra.mxu0 0
  %240 = vmatprep.subr.bf16.mxu0 0
  %241 = vmatpush1.bf16.msra.mxu0 0
  %242 = vmatprep.subr.bf16.mxu0 0
  %243 = vmatpush1.bf16.msra.mxu0 0
  %244 = vmatprep.subr.bf16.mxu0 0
  %245 = vmatpush1.bf16.msra.mxu0 0
  %246 = vmatprep.subr.bf16.mxu0 0
  %247 = vmatpush1.bf16.msra.mxu0 0
  %248 = vmatprep.subr.bf16.mxu0 0
  %249 = vmatpush1.bf16.msra.mxu0 0
  %250 = vmatprep.subr.bf16.mxu0 0
  %251 = vmatpush1.bf16.msra.mxu0 0
  %252 = vmatprep.mubr.bf16.mxu0 0
  %253 = vmatmul.mubr.bf16.gmra.mrb[0].mxu0 %v178
  %v254 = vpop.f32.mrb[0].mxu0
  %v255 = vadd.f32 %v215, %v254
  %v256 = vpop.f32.mrb[0].mxu0
  %v257 = vpop.f32.mrb[0].mxu0
  %v258 = vpop.f32.mrb[0].mxu0
  %259 = vdwg.mxu0
  %v260 = vld [vmem:[%s2] sm:$0x1]
  %v262 = vlaneseq
  %v263 = vshrl.u32 %v262, 7
  %v264 = vsub.s32 0, %v263
  %v265 = vrot.slane %v260, %v264
  %v267 = vmul.f32 %v255, %v265
  %v268 = vld [vmem:[%s3] sm:$0x1]
  %v270 = vlaneseq
  %v271 = vshrl.u32 %v270, 7
  %v272 = vsub.s32 0, %v271
  %v273 = vrot.slane %v268, %v272
  %v275 = vadd.f32 %v267, %v273
  %v276 = vpack.c.bf16 %v275, %v275
  %vm277 = vcmask 519168
  %278 = vst.msk [vmem:[%s4] sm:$0xf] %vm277, %v276
  // Predicated region
  $region18: #{unet_forward.9} parent=0 // pred_check
    _
  $region19: #{unet_forward.9} parent=0 // pred_check_branch
    %280 = sbr.rel (0) target = $region21
  $region20: #{unet_forward.9} parent=0 // pred_region
    _
  $region21: #{unet_forward.9} parent=0 // pred_fallthru
    _
  // Predicated region
  $region22: #{unet_forward.9} parent=0 // pred_check
    _
  $region23: #{unet_forward.9} parent=0 // pred_check_branch
    %282 = sbr.rel (0) target = $region25
  $region24: #{unet_forward.9} parent=0 // pred_region
    _
  $region25: #{unet_forward.9} parent=0 // pred_fallthru
    _

// kernel: unet_forward.10
$region0: #{unet_forward.10}
  #allocation0 [shape = 'u32[]', space=smem, size = 0x4, offset = 0x4, fixed_abs, tag = 'smem constant byte address 0x4 - core index']
  #allocation1 [shape = 'u32[144,128]{1,0:T(1,128)}', space=vmem, size = 0x12000, scoped, tag = 'internal scratch']
  %s0 = inlined_call_operand.vmem [shape: bf16[32,288], index: 0, kind: input, shape index: {}]
  %s1 = inlined_call_operand.vmem [shape: bf16[288,32], index: 1, kind: input, shape index: {}]
  %s2 = inlined_call_operand.vmem [shape: f32[1,32], index: 2, kind: input, shape index: {}]
  %s3 = inlined_call_operand.vmem [shape: f32[1,32], index: 3, kind: input, shape index: {}]
  %s4 = inlined_call_operand.vmem [shape: bf16[32,32], index: 4, kind: output, shape index: {}]
  %s5 = sld [smem:[#allocation0]]
  $region26: #{unet_forward.10} parent=0
    _
  %s7 = ssub.s32 1, %s5
  %s8 = scalar_select 0, %s7, %s5
  // Predicated region
  $region2: #{unet_forward.10} parent=0 // pred_check
    _
  $region3: #{unet_forward.10} parent=0 // pred_check_branch
    %10 = sbr.rel (0) target = $region5
  $region4: #{unet_forward.10} parent=0 // pred_region
    _
  $region5: #{unet_forward.10} parent=0 // pred_fallthru
    _
  // Predicated region
  $region6: #{unet_forward.10} parent=0 // pred_check
    _
  $region7: #{unet_forward.10} parent=0 // pred_check_branch
    %12 = sbr.rel (0) target = $region9
  $region8: #{unet_forward.10} parent=0 // pred_region
    _
  $region9: #{unet_forward.10} parent=0 // pred_fallthru
    _
  // Predicated region
  $region10: #{unet_forward.10} parent=0 // pred_check
    _
  $region11: #{unet_forward.10} parent=0 // pred_check_branch
    %14 = sbr.rel (0) target = $region13
  $region12: #{unet_forward.10} parent=0 // pred_region
    _
  $region13: #{unet_forward.10} parent=0 // pred_fallthru
    _
  // Predicated region
  $region14: #{unet_forward.10} parent=0 // pred_check
    _
  $region15: #{unet_forward.10} parent=0 // pred_check_branch
    %16 = sbr.rel (0) target = $region17
  $region16: #{unet_forward.10} parent=0 // pred_region
    _
  $region17: #{unet_forward.10} parent=0 // pred_fallthru
    _
  %v18 = vld [vmem:[%s0] sm:$0xff]
  %v19 = vld [vmem:[%s0 + $0x8] sm:$0xf]
  %v20 = vld [vmem:[%s0 + $0xc] sm:$0xff]
  %v21 = vld [vmem:[%s0 + $0x14] sm:$0xf]
  %v22 = vld [vmem:[%s0 + $0x18] sm:$0xff]
  %v23 = vld [vmem:[%s0 + $0x20] sm:$0xf]
  %v24 = vld [vmem:[%s0 + $0x24] sm:$0xff]
  %v25 = vld [vmem:[%s0 + $0x2c] sm:$0xf]
  %v26 = vmax.bf16 %v18, 0
  %v27 = vmax.bf16 %v19, 0
  %v28 = vmax.bf16 %v20, 0
  %v29 = vmax.bf16 %v21, 0
  %v30 = vmax.bf16 %v22, 0
  %v31 = vmax.bf16 %v23, 0
  %v32 = vmax.bf16 %v24, 0
  %v33 = vmax.bf16 %v25, 0
  %v34 = vld [vmem:[%s1] sm:$0xf]
  %v35 = vld [vmem:[%s1 + $0x4] sm:$0xf]
  %v36 = vld [vmem:[%s1 + $0x8] sm:$0xf]
  %v37 = vld [vmem:[%s1 + $0xc] sm:$0xf]
  %v38 = vld [vmem:[%s1 + $0x10] sm:$0xf]
  %v39 = vld [vmem:[%s1 + $0x14] sm:$0xf]
  %v40 = vld [vmem:[%s1 + $0x18] sm:$0xf]
  %v41 = vld [vmem:[%s1 + $0x1c] sm:$0xf]
  %v42 = vld [vmem:[%s1 + $0x20] sm:$0xf]
  %v43 = vld [vmem:[%s1 + $0x24] sm:$0xf]
  %v44 = vld [vmem:[%s1 + $0x28] sm:$0xf]
  %v45 = vld [vmem:[%s1 + $0x2c] sm:$0xf]
  %v46 = vld [vmem:[%s1 + $0x30] sm:$0xf]
  %v47 = vld [vmem:[%s1 + $0x34] sm:$0xf]
  %v48 = vld [vmem:[%s1 + $0x38] sm:$0xf]
  %v49 = vld [vmem:[%s1 + $0x3c] sm:$0xf]
  %v50 = vld [vmem:[%s1 + $0x40] sm:$0xf]
  %v51 = vld [vmem:[%s1 + $0x44] sm:$0xf]
  %v52 = vld [vmem:[%s1 + $0x48] sm:$0xf]
  %v53 = vld [vmem:[%s1 + $0x4c] sm:$0xf]
  %v54 = vld [vmem:[%s1 + $0x50] sm:$0xf]
  %v55 = vld [vmem:[%s1 + $0x54] sm:$0xf]
  %v56 = vld [vmem:[%s1 + $0x58] sm:$0xf]
  %v57 = vld [vmem:[%s1 + $0x5c] sm:$0xf]
  %v58 = vld [vmem:[%s1 + $0x60] sm:$0xf]
  %v59 = vld [vmem:[%s1 + $0x64] sm:$0xf]
  %v60 = vld [vmem:[%s1 + $0x68] sm:$0xf]
  %v61 = vld [vmem:[%s1 + $0x6c] sm:$0xf]
  %v62 = vld [vmem:[%s1 + $0x70] sm:$0xf]
  %v63 = vld [vmem:[%s1 + $0x74] sm:$0xf]
  %v64 = vld [vmem:[%s1 + $0x78] sm:$0xf]
  %v65 = vld [vmem:[%s1 + $0x7c] sm:$0xf]
  %v66 = vld [vmem:[%s1 + $0x80] sm:$0xf]
  %v67 = vld [vmem:[%s1 + $0x84] sm:$0xf]
  %v68 = vld [vmem:[%s1 + $0x88] sm:$0xf]
  %v69 = vld [vmem:[%s1 + $0x8c] sm:$0xf]
  %v78 = vunpack.c.l.b16 %v26
  %v79 = vunpack.c.h.b16 %v26
  %v80 = vunpack.c.l.b16 %v27
  %v81 = vunpack.c.l.b16 %v28
  %v82 = vunpack.c.h.b16 %v28
  %v83 = vunpack.c.l.b16 %v29
  %v84 = vunpack.c.l.b16 %v30
  %v85 = vunpack.c.h.b16 %v30
  %v86 = vunpack.c.l.b16 %v31
  %v87 = vunpack.c.l.b16 %v32
  %v88 = vunpack.c.h.b16 %v32
  %v89 = vunpack.c.l.b16 %v33
  %v90 = vpack.c.b16 %v81, %v78
  %v91 = vpack.c.b16 %v82, %v79
  %v92 = vpack.c.b16 %v83, %v80
  %v93 = vpack.c.b16 %v87, %v84
  %v94 = vpack.c.b16 %v88, %v85
  %v95 = vpack.c.b16 %v89, %v86
  %v136 = vunpack.c.l.b16 %v34
  %v137 = vunpack.c.l.b16 %v35
  %v138 = vunpack.c.l.b16 %v36
  %v139 = vunpack.c.l.b16 %v37
  %v140 = vunpack.c.l.b16 %v38
  %v141 = vunpack.c.l.b16 %v39
  %v142 = vunpack.c.l.b16 %v40
  %v143 = vunpack.c.l.b16 %v41
  %v144 = vunpack.c.l.b16 %v42
  %v145 = vunpack.c.l.b16 %v43
  %v146 = vunpack.c.l.b16 %v44
  %v147 = vunpack.c.l.b16 %v45
  %v148 = vunpack.c.l.b16 %v46
  %v149 = vunpack.c.l.b16 %v47
  %v150 = vunpack.c.l.b16 %v48
  %v151 = vunpack.c.l.b16 %v49
  %v152 = vunpack.c.l.b16 %v50
  %v153 = vunpack.c.l.b16 %v51
  %v154 = vunpack.c.l.b16 %v52
  %v155 = vunpack.c.l.b16 %v53
  %v156 = vunpack.c.l.b16 %v54
  %v157 = vunpack.c.l.b16 %v55
  %v158 = vunpack.c.l.b16 %v56
  %v159 = vunpack.c.l.b16 %v57
  %v160 = vunpack.c.l.b16 %v58
  %v161 = vunpack.c.l.b16 %v59
  %v162 = vunpack.c.l.b16 %v60
  %v163 = vunpack.c.l.b16 %v61
  %v164 = vunpack.c.l.b16 %v62
  %v165 = vunpack.c.l.b16 %v63
  %v166 = vunpack.c.l.b16 %v64
  %v167 = vunpack.c.l.b16 %v65
  %v168 = vunpack.c.l.b16 %v66
  %v169 = vunpack.c.l.b16 %v67
  %v170 = vunpack.c.l.b16 %v68
  %v171 = vunpack.c.l.b16 %v69
  %v172 = vpack.c.b16 %v137, %v136
  %v173 = vpack.c.b16 %v139, %v138
  %v174 = vpack.c.b16 %v141, %v140
  %v175 = vpack.c.b16 %v143, %v142
  %v176 = vpack.c.b16 %v145, %v144
  %v177 = vpack.c.b16 %v147, %v146
  %v178 = vpack.c.b16 %v149, %v148
  %v179 = vpack.c.b16 %v151, %v150
  %v180 = vpack.c.b16 %v153, %v152
  %v181 = vpack.c.b16 %v155, %v154
  %v182 = vpack.c.b16 %v157, %v156
  %v183 = vpack.c.b16 %v159, %v158
  %v184 = vpack.c.b16 %v161, %v160
  %v185 = vpack.c.b16 %v163, %v162
  %v186 = vpack.c.b16 %v165, %v164
  %v187 = vpack.c.b16 %v167, %v166
  %v188 = vpack.c.b16 %v169, %v168
  %v189 = vpack.c.b16 %v171, %v170
  %vm208 = vcmask 261120
  %v210 = vsel %vm208, %v92, 0
  %v213 = vsel %vm208, %v95, 0
  %215 = vmatprep.subr.bf16.mxu0 0
  %216 = vmatpush1.bf16.msra.mxu0 %v172
  %217 = vmatprep.subr.bf16.mxu0 0
  %218 = vmatpush1.bf16.msra.mxu0 %v173
  %219 = vmatprep.subr.bf16.mxu0 0
  %220 = vmatpush1.bf16.msra.mxu0 %v174
  %221 = vmatprep.subr.bf16.mxu0 0
  %222 = vmatpush1.bf16.msra.mxu0 %v175
  %223 = vmatprep.subr.bf16.mxu0 0
  %224 = vmatpush1.bf16.msra.mxu0 %v176
  %225 = vmatprep.subr.bf16.mxu0 0
  %226 = vmatpush1.bf16.msra.mxu0 %v177
  %227 = vmatprep.subr.bf16.mxu0 0
  %228 = vmatpush1.bf16.msra.mxu0 %v178
  %229 = vmatprep.subr.bf16.mxu0 0
  %230 = vmatpush1.bf16.msra.mxu0 %v179
  %231 = vmatprep.subr.bf16.mxu0 0
  %232 = vmatpush1.bf16.msra.mxu0 %v180
  %233 = vmatprep.subr.bf16.mxu0 0
  %234 = vmatpush1.bf16.msra.mxu0 %v181
  %235 = vmatprep.subr.bf16.mxu0 0
  %236 = vmatpush1.bf16.msra.mxu0 %v182
  %237 = vmatprep.subr.bf16.mxu0 0
  %238 = vmatpush1.bf16.msra.mxu0 %v183
  %239 = vmatprep.subr.bf16.mxu0 0
  %240 = vmatpush1.bf16.msra.mxu0 %v184
  %241 = vmatprep.subr.bf16.mxu0 0
  %242 = vmatpush1.bf16.msra.mxu0 %v185
  %243 = vmatprep.subr.bf16.mxu0 0
  %244 = vmatpush1.bf16.msra.mxu0 %v186
  %245 = vmatprep.subr.bf16.mxu0 0
  %246 = vmatpush1.bf16.msra.mxu0 %v187
  %247 = vmatprep.mubr.bf16.mxu0 %v91
  %248 = vmatmul.mubr.bf16.gmra.mrb[0].mxu0 %v90
  %v249 = vpop.f32.mrb[0].mxu0
  %v250 = vadd.f32 0.0, %v249
  %v251 = vpop.f32.mrb[0].mxu0
  %v252 = vpop.f32.mrb[0].mxu0
  %v253 = vadd.f32 0.0, %v252
  %v254 = vpop.f32.mrb[0].mxu0
  %255 = vmatprep.mubr.bf16.mxu0 %v94
  %256 = vmatmul.mubr.bf16.gmra.mrb[0].mxu0 %v93
  %v257 = vpop.f32.mrb[0].mxu0
  %v258 = vadd.f32 0.0, %v257
  %v259 = vpop.f32.mrb[0].mxu0
  %v260 = vpop.f32.mrb[0].mxu0
  %v261 = vadd.f32 0.0, %v260
  %v262 = vpop.f32.mrb[0].mxu0
  %263 = vdwg.mxu0
  %264 = vmatprep.subr.bf16.mxu0 0
  %265 = vmatpush1.bf16.msra.mxu0 %v188
  %266 = vmatprep.subr.bf16.mxu0 0
  %267 = vmatpush1.bf16.msra.mxu0 %v189
  %268 = vmatprep.subr.bf16.mxu0 0
  %269 = vmatpush1.bf16.msra.mxu0 0
  %270 = vmatprep.subr.bf16.mxu0 0
  %271 = vmatpush1.bf16.msra.mxu0 0
  %272 = vmatprep.subr.bf16.mxu0 0
  %273 = vmatpush1.bf16.msra.mxu0 0
  %274 = vmatprep.subr.bf16.mxu0 0
  %275 = vmatpush1.bf16.msra.mxu0 0
  %276 = vmatprep.subr.bf16.mxu0 0
  %277 = vmatpush1.bf16.msra.mxu0 0
  %278 = vmatprep.subr.bf16.mxu0 0
  %279 = vmatpush1.bf16.msra.mxu0 0
  %280 = vmatprep.subr.bf16.mxu0 0
  %281 = vmatpush1.bf16.msra.mxu0 0
  %282 = vmatprep.subr.bf16.mxu0 0
  %283 = vmatpush1.bf16.msra.mxu0 0
  %284 = vmatprep.subr.bf16.mxu0 0
  %285 = vmatpush1.bf16.msra.mxu0 0
  %286 = vmatprep.subr.bf16.mxu0 0
  %287 = vmatpush1.bf16.msra.mxu0 0
  %288 = vmatprep.subr.bf16.mxu0 0
  %289 = vmatpush1.bf16.msra.mxu0 0
  %290 = vmatprep.subr.bf16.mxu0 0
  %291 = vmatpush1.bf16.msra.mxu0 0
  %292 = vmatprep.subr.bf16.mxu0 0
  %293 = vmatpush1.bf16.msra.mxu0 0
  %294 = vmatprep.subr.bf16.mxu0 0
  %295 = vmatpush1.bf16.msra.mxu0 0
  %296 = vmatprep.mubr.bf16.mxu0 0
  %297 = vmatmul.mubr.bf16.gmra.mrb[0].mxu0 %v210
  %v298 = vpop.f32.mrb[0].mxu0
  %v299 = vadd.f32 %v250, %v298
  %v300 = vpop.f32.mrb[0].mxu0
  %v301 = vpop.f32.mrb[0].mxu0
  %v302 = vadd.f32 %v253, %v301
  %v303 = vpop.f32.mrb[0].mxu0
  %304 = vmatprep.mubr.bf16.mxu0 0
  %305 = vmatmul.mubr.bf16.gmra.mrb[0].mxu0 %v213
  %v306 = vpop.f32.mrb[0].mxu0
  %v307 = vadd.f32 %v258, %v306
  %v308 = vpop.f32.mrb[0].mxu0
  %v309 = vpop.f32.mrb[0].mxu0
  %v310 = vadd.f32 %v261, %v309
  %v311 = vpop.f32.mrb[0].mxu0
  %312 = vdwg.mxu0
  %v313 = vld [vmem:[%s2] sm:$0x1]
  %v315 = vlaneseq
  %v316 = vshrl.u32 %v315, 7
  %v317 = vsub.s32 0, %v316
  %v318 = vrot.slane %v313, %v317
  %v320 = vmul.f32 %v299, %v318
  %v321 = vmul.f32 %v302, %v318
  %v322 = vmul.f32 %v307, %v318
  %v323 = vmul.f32 %v310, %v318
  %v324 = vld [vmem:[%s3] sm:$0x1]
  %v326 = vlaneseq
  %v327 = vshrl.u32 %v326, 7
  %v328 = vsub.s32 0, %v327
  %v329 = vrot.slane %v324, %v328
  %v331 = vadd.f32 %v320, %v329
  %v332 = vadd.f32 %v321, %v329
  %v333 = vadd.f32 %v322, %v329
  %v334 = vadd.f32 %v323, %v329
  %v335 = vpack.c.bf16 %v332, %v331
  %v336 = vpack.c.bf16 %v334, %v333
  %v339 = vunpack.c.l.b16 %v335
  %v340 = vunpack.c.h.b16 %v335
  %v341 = vunpack.c.l.b16 %v336
  %v342 = vunpack.c.h.b16 %v336
  %v343 = vpack.c.b16 %v339, %v339
  %v344 = vpack.c.b16 %v340, %v340
  %v345 = vpack.c.b16 %v341, %v341
  %v346 = vpack.c.b16 %v342, %v342
  %vm351 = vcmask 257024
  %352 = vst.msk [vmem:[%s4] sm:$0xf] %vm351, %v343
  %353 = vst.msk [vmem:[%s4 + $0x4] sm:$0xf] %vm351, %v344
  %354 = vst.msk [vmem:[%s4 + $0x8] sm:$0xf] %vm351, %v345
  %355 = vst.msk [vmem:[%s4 + $0xc] sm:$0xf] %vm351, %v346
  // Predicated region
  $region18: #{unet_forward.10} parent=0 // pred_check
    _
  $region19: #{unet_forward.10} parent=0 // pred_check_branch
    %357 = sbr.rel (0) target = $region21
  $region20: #{unet_forward.10} parent=0 // pred_region
    _
  $region21: #{unet_forward.10} parent=0 // pred_fallthru
    _
  // Predicated region
  $region22: #{unet_forward.10} parent=0 // pred_check
    _
  $region23: #{unet_forward.10} parent=0 // pred_check_branch
    %359 = sbr.rel (0) target = $region25
  $region24: #{unet_forward.10} parent=0 // pred_region
    _
  $region25: #{unet_forward.10} parent=0 // pred_fallthru
    _

// kernel: unet_forward.11
$region0: #{unet_forward.11}
  #allocation0 [shape = 'u32[]', space=smem, size = 0x4, offset = 0x4, fixed_abs, tag = 'smem constant byte address 0x4 - core index']
  #allocation1 [shape = 'u32[144,128]{1,0:T(1,128)}', space=vmem, size = 0x12000, scoped, tag = 'internal scratch']
  %s0 = inlined_call_operand.vmem [shape: bf16[128,144], index: 0, kind: input, shape index: {}]
  %s1 = inlined_call_operand.vmem [shape: bf16[144,16], index: 1, kind: input, shape index: {}]
  %s2 = inlined_call_operand.vmem [shape: f32[1,16], index: 2, kind: input, shape index: {}]
  %s3 = inlined_call_operand.vmem [shape: f32[1,16], index: 3, kind: input, shape index: {}]
  %s4 = inlined_call_operand.vmem [shape: f32[128,16], index: 4, kind: output, shape index: {}]
  %s5 = sld [smem:[#allocation0]]
  $region49: #{unet_forward.11} parent=0
    _
  %s7 = ssub.s32 1, %s5
  %s8 = scalar_select 0, %s7, %s5
  loop: start=0, step=1, limit=4
  $region2: #{unet_forward.11} parent=0 // loop_pre_header
    _
  $region3: #{unet_forward.11} parent=0 // loop_header
    %s10 = sphi 0, %s14
    %p11 = scmp.ge.s32.totalorder %s10, 4
    %s17 = sphi 0, %s36
    %s18 = sphi 0, %s32
    %s19 = sphi 0, %s28
    %s20 = sphi 0, %s17
    %s21 = sphi 0, %s18
    %s22 = sphi 0, %s19
    %s23 = sphi 0, %s20
    %s24 = sphi 0, %s21
    %s25 = sphi 0, %s22
    %s41 = sphi 0, %s43
    %s44 = sphi 0, %s41
    %s45 = sphi 0, %s44
    %s61 = sphi 0, %s45
    %s69 = sphi 0, %s71
    %s72 = sphi 0, %s69
    %s73 = sphi 0, %s72
    %s89 = sphi 0, %s73
    %s95 = sphi 0, %s97
    %s98 = sphi 0, %s95
    %s99 = sphi 0, %s98
    %s115 = sphi 0, %s99
    %s121 = sphi 0, %s123
    %s124 = sphi 0, %s121
    %s125 = sphi 0, %s124
    %s141 = sphi 0, %s125
    %s149 = sphi 0, %s151
    %s152 = sphi 0, %s149
    %s153 = sphi 0, %s152
    %s169 = sphi 0, %s153
  $region4: #{unet_forward.11} parent=0 // loop_header_branch
    %13 = sbr.rel (%p11) target = $region8
  $region5: #{unet_forward.11} parent=0 // loop_body
    %s15 = ssub.s32 %s10, 1
    %s16 = ssub.s32 %s10, 2
    %s26 = sadd.s32 1, %s19
    %p27 = scmp.ge.s32.totalorder %s26, 1
    %s28 = scalar_select %p27, 0, %s26
    %s29 = sadd.s32 1, %s18
    %s30 = scalar_select %p27, %s29, %s18
    %p31 = scmp.ge.s32.totalorder %s30, 1
    %s32 = scalar_select %p31, 0, %s30
    %s33 = sadd.s32 1, %s17
    %s34 = scalar_select %p31, %s33, %s17
    %p35 = scmp.ge.s32.totalorder %s34, 2
    %s36 = scalar_select %p35, 0, %s34
    %s37 = ssub.s32 %s17, %s36
    %s38 = ssub.s32 %s19, %s28
    %s39 = sor.u32 %s37, %s38
    %p40 = scmp.eq.s32.totalorder %s39, 0
    %s42 = sadd.s32 %s41, 1
    %s43 = scalar_select %p40, %s41, %s42
    %p46 = pneg %p40
    %p47 = scmp.eq.s32.totalorder %s10, 1
    %p48 = por %p46, %p47
    %p49 = scmp.ne.s32.totalorder %s41, %s44
    %p50 = scmp.eq.s32.totalorder %s10, 0
    %p51 = por %p49, %p50
    %p52 = scmp.ne.s32.totalorder %s41, %s44
    %p53 = scmp.eq.s32.totalorder %s15, 1
    %p54 = por %p52, %p53
    %p55 = scmp.ne.s32.totalorder %s44, %s45
    %p56 = scmp.eq.s32.totalorder %s15, 0
    %p57 = por %p55, %p56
    %p58 = scmp.ne.s32.totalorder %s44, %s45
    %p59 = scmp.eq.s32.totalorder %s16, 1
    %p60 = por %p58, %p59
    %p62 = scmp.ne.s32.totalorder %s45, %s61
    %p63 = scmp.eq.s32.totalorder %s16, 0
    %p64 = por %p62, %p63
    %s65 = ssub.s32 %s19, %s28
    %s66 = ssub.s32 %s18, %s32
    %s67 = sor.u32 %s65, %s66
    %p68 = scmp.eq.s32.totalorder %s67, 0
    %s70 = sadd.s32 %s69, 1
    %s71 = scalar_select %p68, %s69, %s70
    %p74 = pneg %p68
    %p75 = scmp.eq.s32.totalorder %s10, 1
    %p76 = por %p74, %p75
    %p77 = scmp.ne.s32.totalorder %s69, %s72
    %p78 = scmp.eq.s32.totalorder %s10, 0
    %p79 = por %p77, %p78
    %p80 = scmp.ne.s32.totalorder %s69, %s72
    %p81 = scmp.eq.s32.totalorder %s15, 1
    %p82 = por %p80, %p81
    %p83 = scmp.ne.s32.totalorder %s72, %s73
    %p84 = scmp.eq.s32.totalorder %s15, 0
    %p85 = por %p83, %p84
    %p86 = scmp.ne.s32.totalorder %s72, %s73
    %p87 = scmp.eq.s32.totalorder %s16, 1
    %p88 = por %p86, %p87
    %p90 = scmp.ne.s32.totalorder %s73, %s89
    %p91 = scmp.eq.s32.totalorder %s16, 0
    %p92 = por %p90, %p91
    %s93 = ssub.s32 %s18, %s32
    %p94 = scmp.eq.s32.totalorder %s93, 0
    %s96 = sadd.s32 %s95, 1
    %s97 = scalar_select %p94, %s95, %s96
    %p100 = pneg %p94
    %p101 = scmp.eq.s32.totalorder %s10, 1
    %p102 = por %p100, %p101
    %p103 = scmp.ne.s32.totalorder %s95, %s98
    %p104 = scmp.eq.s32.totalorder %s10, 0
    %p105 = por %p103, %p104
    %p106 = scmp.ne.s32.totalorder %s95, %s98
    %p107 = scmp.eq.s32.totalorder %s15, 1
    %p108 = por %p106, %p107
    %p109 = scmp.ne.s32.totalorder %s98, %s99
    %p110 = scmp.eq.s32.totalorder %s15, 0
    %p111 = por %p109, %p110
    %p112 = scmp.ne.s32.totalorder %s98, %s99
    %p113 = scmp.eq.s32.totalorder %s16, 1
    %p114 = por %p112, %p113
    %p116 = scmp.ne.s32.totalorder %s99, %s115
    %p117 = scmp.eq.s32.totalorder %s16, 0
    %p118 = por %p116, %p117
    %s119 = ssub.s32 %s18, %s32
    %p120 = scmp.eq.s32.totalorder %s119, 0
    %s122 = sadd.s32 %s121, 1
    %s123 = scalar_select %p120, %s121, %s122
    %p126 = pneg %p120
    %p127 = scmp.eq.s32.totalorder %s10, 1
    %p128 = por %p126, %p127
    %p129 = scmp.ne.s32.totalorder %s121, %s124
    %p130 = scmp.eq.s32.totalorder %s10, 0
    %p131 = por %p129, %p130
    %p132 = scmp.ne.s32.totalorder %s121, %s124
    %p133 = scmp.eq.s32.totalorder %s15, 1
    %p134 = por %p132, %p133
    %p135 = scmp.ne.s32.totalorder %s124, %s125
    %p136 = scmp.eq.s32.totalorder %s15, 0
    %p137 = por %p135, %p136
    %p138 = scmp.ne.s32.totalorder %s124, %s125
    %p139 = scmp.eq.s32.totalorder %s16, 1
    %p140 = por %p138, %p139
    %p142 = scmp.ne.s32.totalorder %s125, %s141
    %p143 = scmp.eq.s32.totalorder %s16, 0
    %p144 = por %p142, %p143
    %s145 = ssub.s32 %s17, %s36
    %s146 = ssub.s32 %s18, %s32
    %s147 = sor.u32 %s145, %s146
    %p148 = scmp.eq.s32.totalorder %s147, 0
    %s150 = sadd.s32 %s149, 1
    %s151 = scalar_select %p148, %s149, %s150
    %p154 = pneg %p148
    %p155 = scmp.eq.s32.totalorder %s10, 1
    %p156 = por %p154, %p155
    %p157 = scmp.ne.s32.totalorder %s149, %s152
    %p158 = scmp.eq.s32.totalorder %s10, 0
    %p159 = por %p157, %p158
    %p160 = scmp.ne.s32.totalorder %s149, %s152
    %p161 = scmp.eq.s32.totalorder %s15, 1
    %p162 = por %p160, %p161
    %p163 = scmp.ne.s32.totalorder %s152, %s153
    %p164 = scmp.eq.s32.totalorder %s15, 0
    %p165 = por %p163, %p164
    %p166 = scmp.ne.s32.totalorder %s152, %s153
    %p167 = scmp.eq.s32.totalorder %s16, 1
    %p168 = por %p166, %p167
    %p170 = scmp.ne.s32.totalorder %s153, %s169
    %p171 = scmp.eq.s32.totalorder %s16, 0
    %p172 = por %p170, %p171
    %p173 = scmp.le.s32.totalorder 1, %s10
    %p174 = scmp.lt.s32.totalorder %s10, 3
    %p175 = pnand %p173, %p174
    %p176 = pneg %p175
    // Predicated region
    $region9: #{unet_forward.11} parent=5 // pred_check
      _
    $region10: #{unet_forward.11} parent=5 // pred_check_branch
      %178 = sbr.rel (%p175) target = $region12
    $region11: #{unet_forward.11} parent=5 // pred_region
      %s179 = ssub.s32 %s10, 1
      // Predicated region
      $region13: #{unet_forward.11} parent=11 // pred_check
        %p180 = pneg %p85
      $region14: #{unet_forward.11} parent=11 // pred_check_branch
        %182 = sbr.rel (%p180) target = $region16
      $region15: #{unet_forward.11} parent=11 // pred_region
        %s183 = smul.u32 18, %s22
        %p184 = scmp.lt.s32.totalorder %s183, 17
        %s185 = scalar_select %p184, %s183, 17
        %p186 = scmp.lt.s32.totalorder %s21, 0
        %s187 = scalar_select %p186, %s21, 0
        %s188 = sadd.s32 %s187, %s185
        %s189 = smul.addr %s188, 4
        %s190 = scalar_lea.vmem %s1, %s189
        %s191 = smul.u32 18, %s22
      $region16: #{unet_forward.11} parent=11 // pred_fallthru
        _
      // Predicated region
      $region17: #{unet_forward.11} parent=11 // pred_check
        %p192 = pneg %p111
      $region18: #{unet_forward.11} parent=11 // pred_check_branch
        %194 = sbr.rel (%p192) target = $region20
      $region19: #{unet_forward.11} parent=11 // pred_region
        %p195 = scmp.lt.s32.totalorder %s21, 0
        %s196 = scalar_select %p195, %s21, 0
        %s197 = scalar_lea.vmem %s2, %s196
      $region20: #{unet_forward.11} parent=11 // pred_fallthru
        _
      // Predicated region
      $region21: #{unet_forward.11} parent=11 // pred_check
        %p198 = pneg %p137
      $region22: #{unet_forward.11} parent=11 // pred_check_branch
        %200 = sbr.rel (%p198) target = $region24
      $region23: #{unet_forward.11} parent=11 // pred_region
        %p201 = scmp.lt.s32.totalorder %s21, 0
        %s202 = scalar_select %p201, %s21, 0
        %s203 = scalar_lea.vmem %s3, %s202
      $region24: #{unet_forward.11} parent=11 // pred_fallthru
        _
    $region12: #{unet_forward.11} parent=5 // pred_fallthru
      _
    %p204 = scmp.lt.s32.totalorder %s10, 2
    // Predicated region
    $region25: #{unet_forward.11} parent=5 // pred_check
      %p205 = pneg %p204
    $region26: #{unet_forward.11} parent=5 // pred_check_branch
      %207 = sbr.rel (%p205) target = $region28
    $region27: #{unet_forward.11} parent=5 // pred_region
      // Predicated region
      $region29: #{unet_forward.11} parent=27 // pred_check
        %p208 = pneg %p51
      $region30: #{unet_forward.11} parent=27 // pred_check_branch
        %210 = sbr.rel (%p208) target = $region32
      $region31: #{unet_forward.11} parent=27 // pred_region
        %s211 = smul.u32 8, %s17
        %s212 = smul.u32 2, %s19
        %p213 = scmp.lt.s32.totalorder %s211, 15
        %s214 = scalar_select %p213, %s211, 15
        %p215 = scmp.lt.s32.totalorder %s212, 1
        %s216 = scalar_select %p215, %s212, 1
        %s217 = smul.addr %s214, 2
        %s218 = sadd.s32 %s216, %s217
        %s219 = smul.addr %s218, 4
        %s220 = scalar_lea.vmem %s0, %s219
        %s221 = smul.u32 8, %s17
        %s222 = smul.u32 2, %s19
      $region32: #{unet_forward.11} parent=27 // pred_fallthru
        _
    $region28: #{unet_forward.11} parent=5 // pred_fallthru
      _
    %p223 = scmp.le.s32.totalorder 1, %s10
    %p224 = scmp.lt.s32.totalorder %s10, 3
    %p225 = pnand %p223, %p224
    %p226 = pneg %p225
    // Predicated region
    $region33: #{unet_forward.11} parent=5 // pred_check
      _
    $region34: #{unet_forward.11} parent=5 // pred_check_branch
      %228 = sbr.rel (%p225) target = $region36
    $region35: #{unet_forward.11} parent=5 // pred_region
      %s229 = ssub.s32 %s10, 1
      %s230 = smul.u32 8, %s20
      %s231 = smul.u32 2, %s22
      %p232 = scmp.lt.s32.totalorder %s230, 15
      %s233 = scalar_select %p232, %s230, 15
      %p234 = scmp.lt.s32.totalorder %s231, 1
      %s235 = scalar_select %p234, %s231, 1
      %s236 = smul.addr %s233, 2
      %s237 = sadd.s32 %s235, %s236
      %s238 = smul.addr %s237, 4
      %s239 = scalar_lea.vmem %s0, %s238
      %p240 = pneg %p57
      %p241 = pneg %p54
      %s242 = smul.u32 18, %s22
      %p243 = scmp.lt.s32.totalorder %s242, 17
      %s244 = scalar_select %p243, %s242, 17
      %p245 = scmp.lt.s32.totalorder %s21, 0
      %s246 = scalar_select %p245, %s21, 0
      %s247 = sadd.s32 %s246, %s244
      %s248 = smul.addr %s247, 4
      %s249 = scalar_lea.vmem %s1, %s248
      %p250 = pneg %p85
      %p251 = pneg %p82
      %p252 = scmp.lt.s32.totalorder %s21, 0
      %s253 = scalar_select %p252, %s21, 0
      %s254 = scalar_lea.vmem %s2, %s253
      %p255 = pneg %p111
      %p256 = pneg %p108
      %p257 = scmp.lt.s32.totalorder %s21, 0
      %s258 = scalar_select %p257, %s21, 0
      %s259 = scalar_lea.vmem %s3, %s258
      %p260 = pneg %p137
      %p261 = pneg %p134
      %p262 = pneg %p165
      %p263 = pneg %p162
      %s264 = smul.u32 8, %s20
      %p265 = scmp.lt.s32.totalorder %s264, 15
      %s266 = scalar_select %p265, %s264, 15
      %p267 = scmp.lt.s32.totalorder %s21, 0
      %s268 = scalar_select %p267, %s21, 0
      %s269 = sadd.s32 %s268, %s266
      %s270 = smul.addr %s269, 8
      %s271 = scalar_lea.vmem %s4, %s270
      %s272 = smul.u32 8, %s20
      %s273 = smul.u32 2, %s22
      %p274 = scmp.lt.s32.totalorder %s272, 15
      %s275 = scalar_select %p274, %s272, 15
      %p276 = scmp.lt.s32.totalorder %s273, 1
      %s277 = scalar_select %p276, %s273, 1
      %s278 = smul.addr %s275, 2
      %s279 = sadd.s32 %s277, %s278
      %s280 = smul.addr %s279, 4
      %s281 = scalar_lea.vmem %s0, %s280
      %s282 = smul.u32 8, %s20
      %s283 = smul.u32 2, %s22
      %s284 = smul.u32 18, %s22
      %p285 = scmp.lt.s32.totalorder %s284, 17
      %s286 = scalar_select %p285, %s284, 17
      %p287 = scmp.lt.s32.totalorder %s21, 0
      %s288 = scalar_select %p287, %s21, 0
      %s289 = sadd.s32 %s288, %s286
      %s290 = smul.addr %s289, 4
      %s291 = scalar_lea.vmem %s1, %s290
      %s292 = smul.u32 18, %s22
      %p293 = scmp.lt.s32.totalorder %s21, 0
      %s294 = scalar_select %p293, %s21, 0
      %s295 = scalar_lea.vmem %s2, %s294
      %p296 = scmp.lt.s32.totalorder %s21, 0
      %s297 = scalar_select %p296, %s21, 0
      %s298 = scalar_lea.vmem %s3, %s297
      %s299 = smul.u32 8, %s20
      %p300 = scmp.lt.s32.totalorder %s299, 15
      %s301 = scalar_select %p300, %s299, 15
      %p302 = scmp.lt.s32.totalorder %s21, 0
      %s303 = scalar_select %p302, %s21, 0
      %s304 = sadd.s32 %s303, %s301
      %s305 = smul.addr %s304, 8
      %s306 = scalar_lea.vmem %s4, %s305
      %s307 = smul.u32 8, %s20
      %v309 = vld [vmem:[%s281] sm:$0xff]
      %v310 = vld [vmem:[%s281 + $0x8] sm:$0xff]
      %v311 = vld [vmem:[%s281 + $0x10] sm:$0xff]
      %v312 = vld [vmem:[%s281 + $0x18] sm:$0xff]
      %v313 = vld [vmem:[%s281 + $0x20] sm:$0xff]
      %v314 = vld [vmem:[%s281 + $0x28] sm:$0xff]
      %v315 = vld [vmem:[%s281 + $0x30] sm:$0xff]
      %v316 = vld [vmem:[%s281 + $0x38] sm:$0xff]
      %v317 = vmax.bf16 %v309, 0
      %v318 = vmax.bf16 %v310, 0
      %v319 = vmax.bf16 %v311, 0
      %v320 = vmax.bf16 %v312, 0
      %v321 = vmax.bf16 %v313, 0
      %v322 = vmax.bf16 %v314, 0
      %v323 = vmax.bf16 %v315, 0
      %v324 = vmax.bf16 %v316, 0
      %v325 = vld [vmem:[%s291] sm:$0xf]
      %v326 = vld [vmem:[%s291 + $0x4] sm:$0xf]
      %v327 = vld [vmem:[%s291 + $0x8] sm:$0xf]
      %v328 = vld [vmem:[%s291 + $0xc] sm:$0xf]
      %v329 = vld [vmem:[%s291 + $0x10] sm:$0xf]
      %v330 = vld [vmem:[%s291 + $0x14] sm:$0xf]
      %v331 = vld [vmem:[%s291 + $0x18] sm:$0xf]
      %v332 = vld [vmem:[%s291 + $0x1c] sm:$0xf]
      %v333 = vld [vmem:[%s291 + $0x20] sm:$0xf]
      %v334 = vld [vmem:[%s291 + $0x24] sm:$0xf]
      %v335 = vld [vmem:[%s291 + $0x28] sm:$0xf]
      %v336 = vld [vmem:[%s291 + $0x2c] sm:$0xf]
      %v337 = vld [vmem:[%s291 + $0x30] sm:$0xf]
      %v338 = vld [vmem:[%s291 + $0x34] sm:$0xf]
      %v339 = vld [vmem:[%s291 + $0x38] sm:$0xf]
      %v340 = vld [vmem:[%s291 + $0x3c] sm:$0xf]
      %v341 = vld [vmem:[%s291 + $0x40] sm:$0xf]
      %v342 = vld [vmem:[%s291 + $0x44] sm:$0xf]
      %v351 = vunpack.c.l.b16 %v317
      %v352 = vunpack.c.h.b16 %v317
      %v353 = vunpack.c.l.b16 %v318
      %v354 = vunpack.c.h.b16 %v318
      %v355 = vunpack.c.l.b16 %v319
      %v356 = vunpack.c.h.b16 %v319
      %v357 = vunpack.c.l.b16 %v320
      %v358 = vunpack.c.h.b16 %v320
      %v359 = vunpack.c.l.b16 %v321
      %v360 = vunpack.c.h.b16 %v321
      %v361 = vunpack.c.l.b16 %v322
      %v362 = vunpack.c.h.b16 %v322
      %v363 = vunpack.c.l.b16 %v323
      %v364 = vunpack.c.h.b16 %v323
      %v365 = vunpack.c.l.b16 %v324
      %v366 = vunpack.c.h.b16 %v324
      %v367 = vpack.c.b16 %v353, %v351
      %v368 = vpack.c.b16 %v354, %v352
      %v369 = vpack.c.b16 %v357, %v355
      %v370 = vpack.c.b16 %v358, %v356
      %v371 = vpack.c.b16 %v361, %v359
      %v372 = vpack.c.b16 %v362, %v360
      %v373 = vpack.c.b16 %v365, %v363
      %v374 = vpack.c.b16 %v366, %v364
      %v397 = vunpack.c.l.b16 %v325
      %v398 = vunpack.c.l.b16 %v326
      %v399 = vunpack.c.l.b16 %v327
      %v400 = vunpack.c.l.b16 %v328
      %v401 = vunpack.c.l.b16 %v329
      %v402 = vunpack.c.l.b16 %v330
      %v403 = vunpack.c.l.b16 %v331
      %v404 = vunpack.c.l.b16 %v332
      %v405 = vunpack.c.l.b16 %v333
      %v406 = vunpack.c.l.b16 %v334
      %v407 = vunpack.c.l.b16 %v335
      %v408 = vunpack.c.l.b16 %v336
      %v409 = vunpack.c.l.b16 %v337
      %v410 = vunpack.c.l.b16 %v338
      %v411 = vunpack.c.l.b16 %v339
      %v412 = vunpack.c.l.b16 %v340
      %v413 = vunpack.c.l.b16 %v341
      %v414 = vunpack.c.l.b16 %v342
      %v415 = vpack.c.b16 %v398, %v397
      %v416 = vpack.c.b16 %v400, %v399
      %v417 = vpack.c.b16 %v402, %v401
      %v418 = vpack.c.b16 %v404, %v403
      %v419 = vpack.c.b16 %v406, %v405
      %v420 = vpack.c.b16 %v408, %v407
      %v421 = vpack.c.b16 %v410, %v409
      %v422 = vpack.c.b16 %v412, %v411
      %v423 = vpack.c.b16 %v414, %v413
      %vm433 = vcmask 130048
      %v435 = vsel %vm433, %v368, 0
      %v438 = vsel %vm433, %v370, 0
      %v441 = vsel %vm433, %v372, 0
      %v444 = vsel %vm433, %v374, 0
      %446 = vmatprep.subr.bf16.mxu0 0
      %447 = vmatpush1.bf16.msra.mxu0 %v415
      %448 = vmatprep.subr.bf16.mxu0 0
      %449 = vmatpush1.bf16.msra.mxu0 %v416
      %450 = vmatprep.subr.bf16.mxu0 0
      %451 = vmatpush1.bf16.msra.mxu0 %v417
      %452 = vmatprep.subr.bf16.mxu0 0
      %453 = vmatpush1.bf16.msra.mxu0 %v418
      %454 = vmatprep.subr.bf16.mxu0 0
      %455 = vmatpush1.bf16.msra.mxu0 %v419
      %456 = vmatprep.subr.bf16.mxu0 0
      %457 = vmatpush1.bf16.msra.mxu0 %v420
      %458 = vmatprep.subr.bf16.mxu0 0
      %459 = vmatpush1.bf16.msra.mxu0 %v421
      %460 = vmatprep.subr.bf16.mxu0 0
      %461 = vmatpush1.bf16.msra.mxu0 %v422
      %462 = vmatprep.subr.bf16.mxu0 0
      %463 = vmatpush1.bf16.msra.mxu0 %v423
      %464 = vmatprep.subr.bf16.mxu0 0
      %465 = vmatpush1.bf16.msra.mxu0 0
      %466 = vmatprep.subr.bf16.mxu0 0
      %467 = vmatpush1.bf16.msra.mxu0 0
      %468 = vmatprep.subr.bf16.mxu0 0
      %469 = vmatpush1.bf16.msra.mxu0 0
      %470 = vmatprep.subr.bf16.mxu0 0
      %471 = vmatpush1.bf16.msra.mxu0 0
      %472 = vmatprep.subr.bf16.mxu0 0
      %473 = vmatpush1.bf16.msra.mxu0 0
      %474 = vmatprep.subr.bf16.mxu0 0
      %475 = vmatpush1.bf16.msra.mxu0 0
      %476 = vmatprep.subr.bf16.mxu0 0
      %477 = vmatpush1.bf16.msra.mxu0 0
      %478 = vmatprep.mubr.bf16.mxu0 %v435
      %479 = vmatmul.mubr.bf16.gmra.mrb[0].mxu0 %v367
      %v480 = vpop.f32.mrb[0].mxu0
      %v481 = vadd.f32 0.0, %v480
      %v482 = vpop.f32.mrb[0].mxu0
      %v483 = vpop.f32.mrb[0].mxu0
      %v484 = vadd.f32 0.0, %v483
      %v485 = vpop.f32.mrb[0].mxu0
      %486 = vmatprep.mubr.bf16.mxu0 %v438
      %487 = vmatmul.mubr.bf16.gmra.mrb[0].mxu0 %v369
      %v488 = vpop.f32.mrb[0].mxu0
      %v489 = vadd.f32 0.0, %v488
      %v490 = vpop.f32.mrb[0].mxu0
      %v491 = vpop.f32.mrb[0].mxu0
      %v492 = vadd.f32 0.0, %v491
      %v493 = vpop.f32.mrb[0].mxu0
      %494 = vmatprep.mubr.bf16.mxu0 %v441
      %495 = vmatmul.mubr.bf16.gmra.mrb[0].mxu0 %v371
      %v496 = vpop.f32.mrb[0].mxu0
      %v497 = vadd.f32 0.0, %v496
      %v498 = vpop.f32.mrb[0].mxu0
      %v499 = vpop.f32.mrb[0].mxu0
      %v500 = vadd.f32 0.0, %v499
      %v501 = vpop.f32.mrb[0].mxu0
      %502 = vmatprep.mubr.bf16.mxu0 %v444
      %503 = vmatmul.mubr.bf16.gmra.mrb[0].mxu0 %v373
      %v504 = vpop.f32.mrb[0].mxu0
      %v505 = vadd.f32 0.0, %v504
      %v506 = vpop.f32.mrb[0].mxu0
      %v507 = vpop.f32.mrb[0].mxu0
      %v508 = vadd.f32 0.0, %v507
      %v509 = vpop.f32.mrb[0].mxu0
      %510 = vdwg.mxu0
      %v511 = vld [vmem:[%s295] sm:$0x1]
      %v513 = vlaneseq
      %v514 = vshrl.u32 %v513, 7
      %v515 = vsub.s32 0, %v514
      %v516 = vrot.slane %v511, %v515
      %v518 = vmul.f32 %v481, %v516
      %v519 = vmul.f32 %v484, %v516
      %v520 = vmul.f32 %v489, %v516
      %v521 = vmul.f32 %v492, %v516
      %v522 = vmul.f32 %v497, %v516
      %v523 = vmul.f32 %v500, %v516
      %v524 = vmul.f32 %v505, %v516
      %v525 = vmul.f32 %v508, %v516
      %v526 = vld [vmem:[%s298] sm:$0x1]
      %v528 = vlaneseq
      %v529 = vshrl.u32 %v528, 7
      %v530 = vsub.s32 0, %v529
      %v531 = vrot.slane %v526, %v530
      %v533 = vadd.f32 %v518, %v531
      %v534 = vadd.f32 %v519, %v531
      %v535 = vadd.f32 %v520, %v531
      %v536 = vadd.f32 %v521, %v531
      %v537 = vadd.f32 %v522, %v531
      %v538 = vadd.f32 %v523, %v531
      %v539 = vadd.f32 %v524, %v531
      %v540 = vadd.f32 %v525, %v531
      %v541 = vtanh.pop %v533
      %v542 = vtanh.pop %v534
      %v543 = vtanh.pop %v535
      %v544 = vtanh.pop %v536
      %v545 = vtanh.pop %v537
      %v546 = vtanh.pop %v538
      %v547 = vtanh.pop %v539
      %v548 = vtanh.pop %v540
      %549 = vst.msk [vmem:[%s306] sm:$0xff] %vm433, %v541
      %550 = vst.msk [vmem:[%s306 + $0x8] sm:$0xff] %vm433, %v542
      %551 = vst.msk [vmem:[%s306 + $0x10] sm:$0xff] %vm433, %v543
      %552 = vst.msk [vmem:[%s306 + $0x18] sm:$0xff] %vm433, %v544
      %553 = vst.msk [vmem:[%s306 + $0x20] sm:$0xff] %vm433, %v545
      %554 = vst.msk [vmem:[%s306 + $0x28] sm:$0xff] %vm433, %v546
      %555 = vst.msk [vmem:[%s306 + $0x30] sm:$0xff] %vm433, %v547
      %556 = vst.msk [vmem:[%s306 + $0x38] sm:$0xff] %vm433, %v548
      %s557 = smul.u32 8, %s20
      %p558 = scmp.lt.s32.totalorder %s557, 15
      %s559 = scalar_select %p558, %s557, 15
      %p560 = scmp.lt.s32.totalorder %s21, 0
      %s561 = scalar_select %p560, %s21, 0
      %s562 = sadd.s32 %s561, %s559
      %s563 = smul.addr %s562, 8
      %s564 = scalar_lea.vmem %s4, %s563
      // Predicated region
      $region37: #{unet_forward.11} parent=35 // pred_check
        %p565 = pneg %p162
      $region38: #{unet_forward.11} parent=35 // pred_check_branch
        %567 = sbr.rel (%p565) target = $region40
      $region39: #{unet_forward.11} parent=35 // pred_region
        %s568 = smul.u32 8, %s20
      $region40: #{unet_forward.11} parent=35 // pred_fallthru
        _
    $region36: #{unet_forward.11} parent=5 // pred_fallthru
      _
    %p569 = scmp.le.s32.totalorder 2, %s10
    // Predicated region
    $region41: #{unet_forward.11} parent=5 // pred_check
      %p570 = pneg %p569
    $region42: #{unet_forward.11} parent=5 // pred_check_branch
      %572 = sbr.rel (%p570) target = $region44
    $region43: #{unet_forward.11} parent=5 // pred_region
      %s573 = ssub.s32 %s10, 2
      // Predicated region
      $region45: #{unet_forward.11} parent=43 // pred_check
        %p574 = pneg %p168
      $region46: #{unet_forward.11} parent=43 // pred_check_branch
        %576 = sbr.rel (%p574) target = $region48
      $region47: #{unet_forward.11} parent=43 // pred_region
        %s577 = smul.u32 8, %s23
        %p578 = scmp.lt.s32.totalorder %s577, 15
        %s579 = scalar_select %p578, %s577, 15
        %p580 = scmp.lt.s32.totalorder %s24, 0
        %s581 = scalar_select %p580, %s24, 0
        %s582 = sadd.s32 %s581, %s579
        %s583 = smul.addr %s582, 8
        %s584 = scalar_lea.vmem %s4, %s583
      $region48: #{unet_forward.11} parent=43 // pred_fallthru
        _
    $region44: #{unet_forward.11} parent=5 // pred_fallthru
      _
  $region6: #{unet_forward.11} parent=0 // loop_footer
    %s14 = sadd.s32 1, %s10
  $region7: #{unet_forward.11} parent=0 // loop_footer_branch
    %9 = sbr.rel target = $region3
  $region8: #{unet_forward.11} parent=0 // loop_exit
    _

</llo_original>
